<compile_context>
chip_gen: v7x
topology: tpu7x:2x2x1
jax: 0.10.0
libtpu: 0.0.40
codegen_flags: <defaults>
</compile_context>

<pallas_src>
import jax
import jax.numpy as jnp
from jax import lax
from jax.experimental import pallas as pl
from jax.experimental.pallas import tpu as pltpu


# ----------------------------------------------------------------------------
# Pallas kernel (one grid step = one batch-aligned row tile).
# ----------------------------------------------------------------------------
def _make_stdgi_kernel(mm_dtype):
    f32 = jnp.float32

    def kernel(
        x_ref,        # (rows, in_ft)            encoder input tile (rows = TB*N)
        xp_ref,       # (rows, in_ft)            x_k tile (positive head)
        xn_ref,       # (rows, in_ft)            x_c tile (negative head)
        adj_ref,      # (rows, rows)             block-diagonal I_TB (x) adj (pinned)
        w0_ref, b0_ref,   # (in_ft, h1), (1, h1)
        w1_ref, b1_ref,   # (h1, h2),   (1, h2)
        w2_ref, b2_ref,   # (h2, out_ft), (1, out_ft)
        wb_ref, bb_ref,   # (out_ft, dis_hid*in_ft), (1, dis_hid)   packed bilinear weight
        wl_ref, bl_ref,   # (1, dis_hid), (1, 1)
        s_ref,            # (dis_hid*in_ft, dis_hid)  constant 0/1 segment-sum matrix
        out_ref,          # (1, 1, padw)              lane-dense, 128-padded output tile
    ):
        relu = lambda a: jnp.maximum(a, 0.0)
        cast = lambda a: a.astype(mm_dtype)

        rows = x_ref.shape[0]
        dis_hid = bb_ref.shape[-1]
        padw = out_ref.shape[-1]

        # ---------------- Encoder (batch folded into rows) ----------------
        x = x_ref[...]
        a1 = relu(jnp.dot(cast(x), cast(w0_ref[...]), preferred_element_type=f32) + b0_ref[...])
        a2 = relu(jnp.dot(cast(a1), cast(w1_ref[...]), preferred_element_type=f32) + b1_ref[...])
        # one block-diagonal matmul replaces the per-batch adj loop + concatenate
        h3 = jnp.dot(cast(adj_ref[...]), cast(a2), preferred_element_type=f32)
        h = relu(jnp.dot(cast(h3), cast(w2_ref[...]), preferred_element_type=f32) + b2_ref[...])

        # ---------------- Discriminator ----------------
        # t is computed once on `rows` rows and shared by both heads (no hd duplication).
        t = jnp.dot(cast(h), cast(wb_ref[...]), preferred_element_type=f32)  # [rows, dis_hid*in_ft]
        s_mat = s_ref[...]
        bb = bb_ref[...]
        wl = wl_ref[...]
        bl = bl_ref[...]

        def head(x_side):
            # Bilinear(h, x): bil[m,k] = sum_j t[m, k*F+j] * x[m, j]
            # x is lane-tiled dis_hid times at TILE scope only (tiny per-tile copy),
            # then segment-summed via the constant 0/1 matrix.
            xt = jnp.concatenate([x_side] * dis_hid, axis=1)           # [rows, dis_hid*in_ft]
            bil = jnp.dot(cast(t * xt), cast(s_mat), preferred_element_type=f32) + bb
            r = relu(bil)                                              # [rows, dis_hid]
            # lane-dense [1, rows] logits; contract r's last dim (no explicit transpose)
            return lax.dot_general(wl, r, dimension_numbers=(((1,), (1,)), ((), ())),
                                   preferred_element_type=f32) + bl

        logits = jnp.concatenate([head(xp_ref[...]), head(xn_ref[...])], axis=1)  # [1, 2*rows]
        sig = jax.nn.sigmoid(logits)

        # pad to a 128-lane multiple -> single full-width unmasked store
        if padw > 2 * rows:
            sig = jnp.concatenate([sig, jnp.zeros((1, padw - 2 * rows), f32)], axis=1)
        out_ref[...] = sig.reshape(1, 1, padw)

    return kernel


# ----------------------------------------------------------------------------
# Wrapper: corruption, batch folding, grid/BlockSpec plumbing.
# ----------------------------------------------------------------------------
def stdgi_forward(x, x_k, adj, params, corrupt_key, *, batches_per_tile=None):
    B, N, in_ft = x.shape
    dis_hid = params["bb"].shape[-1]
    h1 = params["w0"].shape[-1]
    h2 = params["w1"].shape[-1]
    out_ft = params["w2"].shape[-1]

    # corrupt(): shuffle the node axis of x_k (deterministic permutation here)
    perm = jax.random.permutation(corrupt_key, N)
    x_c = x_k[:, perm, :]

    # ---- row-tile sizing (tiles are batch-aligned so adj propagation stays local) ----
    if batches_per_tile is None:
        batches_per_tile = max(1, min(B, 512 // N))   # target ~512 encoder rows / tile
    while B % batches_per_tile != 0:
        batches_per_tile -= 1
    TB = batches_per_tile
    num_tiles = B // TB
    rows = TB * N
    padw = ((2 * rows + 127) // 128) * 128            # lane-dense padded output width

    # fold batch into rows; keep pos/neg discriminator inputs separate so the kernel
    # reuses t = h @ Wb for both heads
    x2 = x.reshape(B * N, in_ft)
    xp = x_k.reshape(B * N, in_ft)
    xn = x_c.reshape(B * N, in_ft)

    # per-tile block-diagonal adjacency (I_TB (x) adj): one MXU matmul per grid step
    adj_blk = jnp.kron(jnp.eye(TB, dtype=adj.dtype), adj)

    # constant 0/1 segment-sum matrix, built once on the host (not iota per grid step)
    s_mat = ((jnp.arange(dis_hid * in_ft) // in_ft)[:, None]
             == jnp.arange(dis_hid)[None, :]).astype(jnp.float32)

    wl_row = params["wl"].reshape(1, dis_hid)

    operands = (
        x2, xp, xn, adj_blk,
        params["w0"], params["b0"], params["w1"], params["b1"],
        params["w2"], params["b2"],
        params["wb_packed"], params["bb"],
        wl_row, params["bl"], s_mat,
    )

    def pinned(arr):
        nd = arr.ndim
        return pl.BlockSpec(arr.shape, lambda i, _nd=nd: (0,) * _nd)

    in_specs = [
        pl.BlockSpec((rows, in_ft), lambda i: (i, 0)),      # x2  tile
        pl.BlockSpec((rows, in_ft), lambda i: (i, 0)),      # x_k tile
        pl.BlockSpec((rows, in_ft), lambda i: (i, 0)),      # x_c tile
    ] + [pinned(a) for a in operands[3:]]                   # weights / adj / s_mat pinned

    # bf16 MXU feeds once the folded row tile is big enough (v6e/v7x); f32 at toy size
    mm_dtype = jnp.bfloat16 if rows >= 256 else jnp.float32

    # rough cost hint so XLA schedules neighbours around the call
    flops = (2 * B * N * (in_ft * h1 + h1 * h2 + rows * h2 + h2 * out_ft
                          + out_ft * dis_hid * in_ft)
             + 2 * (2 * B * N) * dis_hid * in_ft * (dis_hid + 2))
    bytes_accessed = sum(int(a.size) * 4 for a in operands) + num_tiles * padw * 4
    cost = pl.CostEstimate(flops=int(flops), transcendentals=int(2 * B * N),
                           bytes_accessed=int(bytes_accessed))

    out = pl.pallas_call(
        _make_stdgi_kernel(mm_dtype),
        out_shape=jax.ShapeDtypeStruct((num_tiles, 1, padw), jnp.float32),
        grid=(num_tiles,),
        in_specs=in_specs,
        out_specs=pl.BlockSpec((1, 1, padw), lambda i: (i, 0, 0)),
        compiler_params=pltpu.CompilerParams(
            dimension_semantics=("parallel",)),   # tiles independent -> megacore on v7x
        cost_estimate=cost,
    )(*operands)

    # layout plumbing back to the module's [B, 2N, 1] (pos|neg per batch)
    valid = out[:, 0, :2 * rows].reshape(num_tiles, 2, TB, N)
    return jnp.transpose(valid, (0, 2, 1, 3)).reshape(B, 2 * N, 1)


# ----------------------------------------------------------------------------
# Pure-JAX reference (same math, no Pallas) for a correctness assert.
# ----------------------------------------------------------------------------
def stdgi_reference(x, x_k, adj, params, corrupt_key):
    relu = lambda a: jnp.maximum(a, 0.0)
    N = x.shape[1]
    perm = jax.random.permutation(corrupt_key, N)
    x_c = x_k[:, perm, :]

    h1 = relu(x @ params["w0"] + params["b0"])
    h2 = relu(h1 @ params["w1"] + params["b1"])
    h3 = jnp.einsum("nm,bmf->bnf", adj, h2)
    h = relu(h3 @ params["w2"] + params["b2"])

    def head(xx):
        bil = jnp.einsum("bni,kij,bnj->bnk", h, params["wb"], xx) + params["bb"][0]
        return jax.nn.sigmoid(relu(bil) @ params["wl"] + params["bl"])

    return jnp.concatenate([head(x_k), head(x_c)], axis=1)


# ----------------------------------------------------------------------------
# Deterministic parameter construction.
# ----------------------------------------------------------------------------
def make_params(key, in_ft, out_ft, en_hid1, en_hid2, dis_hid):
    ks = jax.random.split(key, 8)
    norm = lambda k, shp, scale: (scale * jax.random.normal(k, shp)).astype(jnp.float32)

    w0 = norm(ks[0], (in_ft, en_hid1), 0.2)
    b0 = norm(ks[1], (1, en_hid1), 0.1)
    w1 = norm(ks[2], (en_hid1, en_hid2), 0.2)
    b1 = norm(ks[3], (1, en_hid2), 0.1)
    w2 = norm(ks[4], (en_hid2, out_ft), 0.2)
    b2 = norm(ks[5], (1, out_ft), 0.1)

    wb = norm(ks[6], (dis_hid, out_ft, in_ft), 0.2)        # nn.Bilinear weight [out, in1, in2]
    bb = norm(ks[7], (1, dis_hid), 0.1)
    # pack:  wb_packed[i, k*in_ft + j] = wb[k, i, j]
    wb_packed = jnp.transpose(wb, (1, 0, 2)).reshape(out_ft, dis_hid * in_ft)

    wl = norm(jax.random.fold_in(key, 100), (dis_hid, 1), 0.3)
    bl = jnp.zeros((1, 1), jnp.float32)

    return dict(w0=w0, b0=b0, w1=w1, b1=b1, w2=w2, b2=b2,
                wb=wb, wb_packed=wb_packed, bb=bb, wl=wl, bl=bl)


if __name__ == "__main__":
    # Small shapes consistent with STDGI(in_ft, out_ft, en_hid1, en_hid2, dis_hid)
    B, N = 2, 16
    in_ft, out_ft, en_hid1, en_hid2, dis_hid = 8, 16, 32, 32, 8

    root = jax.random.PRNGKey(0)
    k_x, k_xk, k_adj, k_param, k_perm = jax.random.split(root, 5)

    x = jax.random.normal(k_x, (B, N, in_ft), jnp.float32)
    x_k = jax.random.normal(k_xk, (B, N, in_ft), jnp.float32)
    # row-normalized random adjacency (dense, [N, N])
    adj_raw = jax.nn.relu(jax.random.normal(k_adj, (N, N), jnp.float32)) + jnp.eye(N)
    adj = adj_raw / jnp.sum(adj_raw, axis=-1, keepdims=True)

    params = make_params(k_param, in_ft, out_ft, en_hid1, en_hid2, dis_hid)

    ref = stdgi_reference(x, x_k, adj, params, k_perm)

    # Config 1: default tile sizing (all batches in one tile -> grid=(1,))
    out1 = jax.block_until_ready(stdgi_forward(x, x_k, adj, params, k_perm))
    # Config 2: one batch per tile -> grid=(2,), exercising the row-tiled pipeline path
    out2 = jax.block_until_ready(
        stdgi_forward(x, x_k, adj, params, k_perm, batches_per_tile=1))

    for out in (out1, out2):
        assert out.shape == (B, 2 * N, 1), out.shape
        assert jnp.allclose(out, ref, atol=1e-5, rtol=1e-5), float(jnp.max(jnp.abs(out - ref)))

    print("KERNEL_OK")
</pallas_src>

<mosaic_0001>
module attributes {stable_mosaic.version = 11 : i64} {
  func.func @kernel(%arg0: i32, %arg1: memref<32x8xf32, #tpu.memory_space<vmem>>, %arg2: memref<32x8xf32, #tpu.memory_space<vmem>>, %arg3: memref<32x8xf32, #tpu.memory_space<vmem>>, %arg4: memref<32x32xf32, #tpu.memory_space<vmem>>, %arg5: memref<8x32xf32, #tpu.memory_space<vmem>>, %arg6: memref<1x32xf32, #tpu.memory_space<vmem>>, %arg7: memref<32x32xf32, #tpu.memory_space<vmem>>, %arg8: memref<1x32xf32, #tpu.memory_space<vmem>>, %arg9: memref<32x16xf32, #tpu.memory_space<vmem>>, %arg10: memref<1x16xf32, #tpu.memory_space<vmem>>, %arg11: memref<16x64xf32, #tpu.memory_space<vmem>>, %arg12: memref<1x8xf32, #tpu.memory_space<vmem>>, %arg13: memref<1x8xf32, #tpu.memory_space<vmem>>, %arg14: memref<1x1xf32, #tpu.memory_space<vmem>>, %arg15: memref<64x8xf32, #tpu.memory_space<vmem>>, %arg16: memref<1x1x128xf32, #tpu.memory_space<vmem>>) attributes {dimension_semantics = [#tpu.dimension_semantics<parallel>], iteration_bounds = array<i64: 1>, scalar_prefetch = 0 : i64, scratch_operands = 0 : i64, tpu.core_type = #tpu.core_type<tc>, window_params = [{transform_indices = @transform_0, window_bounds = array<i64: 32, 8>}, {transform_indices = @transform_1, window_bounds = array<i64: 32, 8>}, {transform_indices = @transform_2, window_bounds = array<i64: 32, 8>}, {pipeline_mode = #tpu.pipeline_mode<synchronous>, transform_indices = @transform_3, window_bounds = array<i64: 32, 32>}, {pipeline_mode = #tpu.pipeline_mode<synchronous>, transform_indices = @transform_4, window_bounds = array<i64: 8, 32>}, {pipeline_mode = #tpu.pipeline_mode<synchronous>, transform_indices = @transform_5, window_bounds = array<i64: 1, 32>}, {pipeline_mode = #tpu.pipeline_mode<synchronous>, transform_indices = @transform_6, window_bounds = array<i64: 32, 32>}, {pipeline_mode = #tpu.pipeline_mode<synchronous>, transform_indices = @transform_7, window_bounds = array<i64: 1, 32>}, {pipeline_mode = #tpu.pipeline_mode<synchronous>, transform_indices = @transform_8, window_bounds = array<i64: 32, 16>}, {pipeline_mode = #tpu.pipeline_mode<synchronous>, transform_indices = @transform_9, window_bounds = array<i64: 1, 16>}, {pipeline_mode = #tpu.pipeline_mode<synchronous>, transform_indices = @transform_10, window_bounds = array<i64: 16, 64>}, {pipeline_mode = #tpu.pipeline_mode<synchronous>, transform_indices = @transform_11, window_bounds = array<i64: 1, 8>}, {pipeline_mode = #tpu.pipeline_mode<synchronous>, transform_indices = @transform_12, window_bounds = array<i64: 1, 8>}, {pipeline_mode = #tpu.pipeline_mode<synchronous>, transform_indices = @transform_13, window_bounds = array<i64: 1, 1>}, {pipeline_mode = #tpu.pipeline_mode<synchronous>, transform_indices = @transform_14, window_bounds = array<i64: 64, 8>}, {transform_indices = @transform_15, window_bounds = array<i64: 1, 1, 128>}]} {
    %c0 = arith.constant 0 : index
    %c0_0 = arith.constant 0 : index
    %0 = vector.load %arg1[%c0, %c0_0] : memref<32x8xf32, #tpu.memory_space<vmem>>, vector<32x8xf32>
    %c0_1 = arith.constant 0 : index
    %c0_2 = arith.constant 0 : index
    %1 = vector.load %arg5[%c0_1, %c0_2] : memref<8x32xf32, #tpu.memory_space<vmem>>, vector<8x32xf32>
    %cst = arith.constant dense<0.000000e+00> : vector<32x32xf32>
    %2 = tpu.matmul %0, %1, %cst {dimension_numbers = #tpu.dot_dimension_numbers<[1], [0], [0], [1], [0, 0, 1, 1], [], []>} : vector<32x8xf32>, vector<8x32xf32>, vector<32x32xf32> -> vector<32x32xf32>
    %c0_3 = arith.constant 0 : index
    %c0_4 = arith.constant 0 : index
    %3 = vector.load %arg6[%c0_3, %c0_4] : memref<1x32xf32, #tpu.memory_space<vmem>>, vector<1x32xf32>
    %4 = vector.broadcast %3 : vector<1x32xf32> to vector<32x32xf32>
    %5 = arith.addf %2, %4 : vector<32x32xf32>
    %cst_5 = arith.constant 0.000000e+00 : f32
    %6 = vector.broadcast %cst_5 : f32 to vector<32x32xf32>
    %7 = arith.maximumf %5, %6 : vector<32x32xf32>
    %c0_6 = arith.constant 0 : index
    %c0_7 = arith.constant 0 : index
    %8 = vector.load %arg7[%c0_6, %c0_7] : memref<32x32xf32, #tpu.memory_space<vmem>>, vector<32x32xf32>
    %cst_8 = arith.constant dense<0.000000e+00> : vector<32x32xf32>
    %9 = tpu.matmul %7, %8, %cst_8 {dimension_numbers = #tpu.dot_dimension_numbers<[1], [0], [0], [1], [0, 0, 1, 1], [], []>} : vector<32x32xf32>, vector<32x32xf32>, vector<32x32xf32> -> vector<32x32xf32>
    %c0_9 = arith.constant 0 : index
    %c0_10 = arith.constant 0 : index
    %10 = vector.load %arg8[%c0_9, %c0_10] : memref<1x32xf32, #tpu.memory_space<vmem>>, vector<1x32xf32>
    %11 = vector.broadcast %10 : vector<1x32xf32> to vector<32x32xf32>
    %12 = arith.addf %9, %11 : vector<32x32xf32>
    %cst_11 = arith.constant 0.000000e+00 : f32
    %13 = vector.broadcast %cst_11 : f32 to vector<32x32xf32>
    %14 = arith.maximumf %12, %13 : vector<32x32xf32>
    %c0_12 = arith.constant 0 : index
    %c0_13 = arith.constant 0 : index
    %15 = vector.load %arg4[%c0_12, %c0_13] : memref<32x32xf32, #tpu.memory_space<vmem>>, vector<32x32xf32>
    %cst_14 = arith.constant dense<0.000000e+00> : vector<32x32xf32>
    %16 = tpu.matmul %15, %14, %cst_14 {dimension_numbers = #tpu.dot_dimension_numbers<[1], [0], [0], [1], [0, 0, 1, 1], [], []>} : vector<32x32xf32>, vector<32x32xf32>, vector<32x32xf32> -> vector<32x32xf32>
    %c0_15 = arith.constant 0 : index
    %c0_16 = arith.constant 0 : index
    %17 = vector.load %arg9[%c0_15, %c0_16] : memref<32x16xf32, #tpu.memory_space<vmem>>, vector<32x16xf32>
    %cst_17 = arith.constant dense<0.000000e+00> : vector<32x16xf32>
    %18 = tpu.matmul %16, %17, %cst_17 {dimension_numbers = #tpu.dot_dimension_numbers<[1], [0], [0], [1], [0, 0, 1, 1], [], []>} : vector<32x32xf32>, vector<32x16xf32>, vector<32x16xf32> -> vector<32x16xf32>
    %c0_18 = arith.constant 0 : index
    %c0_19 = arith.constant 0 : index
    %19 = vector.load %arg10[%c0_18, %c0_19] : memref<1x16xf32, #tpu.memory_space<vmem>>, vector<1x16xf32>
    %20 = vector.broadcast %19 : vector<1x16xf32> to vector<32x16xf32>
    %21 = arith.addf %18, %20 : vector<32x16xf32>
    %cst_20 = arith.constant 0.000000e+00 : f32
    %22 = vector.broadcast %cst_20 : f32 to vector<32x16xf32>
    %23 = arith.maximumf %21, %22 : vector<32x16xf32>
    %c0_21 = arith.constant 0 : index
    %c0_22 = arith.constant 0 : index
    %24 = vector.load %arg11[%c0_21, %c0_22] : memref<16x64xf32, #tpu.memory_space<vmem>>, vector<16x64xf32>
    %cst_23 = arith.constant dense<0.000000e+00> : vector<32x64xf32>
    %25 = tpu.matmul %23, %24, %cst_23 {dimension_numbers = #tpu.dot_dimension_numbers<[1], [0], [0], [1], [0, 0, 1, 1], [], []>} : vector<32x16xf32>, vector<16x64xf32>, vector<32x64xf32> -> vector<32x64xf32>
    %c0_24 = arith.constant 0 : index
    %c0_25 = arith.constant 0 : index
    %26 = vector.load %arg15[%c0_24, %c0_25] : memref<64x8xf32, #tpu.memory_space<vmem>>, vector<64x8xf32>
    %c0_26 = arith.constant 0 : index
    %c0_27 = arith.constant 0 : index
    %27 = vector.load %arg12[%c0_26, %c0_27] : memref<1x8xf32, #tpu.memory_space<vmem>>, vector<1x8xf32>
    %c0_28 = arith.constant 0 : index
    %c0_29 = arith.constant 0 : index
    %28 = vector.load %arg13[%c0_28, %c0_29] : memref<1x8xf32, #tpu.memory_space<vmem>>, vector<1x8xf32>
    %c0_30 = arith.constant 0 : index
    %c0_31 = arith.constant 0 : index
    %29 = vector.load %arg14[%c0_30, %c0_31] : memref<1x1xf32, #tpu.memory_space<vmem>>, vector<1x1xf32>
    %c0_32 = arith.constant 0 : index
    %c0_33 = arith.constant 0 : index
    %30 = vector.load %arg2[%c0_32, %c0_33] : memref<32x8xf32, #tpu.memory_space<vmem>>, vector<32x8xf32>
    %31 = tpu.concatenate %30, %30, %30, %30, %30, %30, %30, %30 in 1 : vector<32x8xf32>, vector<32x8xf32>, vector<32x8xf32>, vector<32x8xf32>, vector<32x8xf32>, vector<32x8xf32>, vector<32x8xf32>, vector<32x8xf32> -> vector<32x64xf32>
    %32 = arith.mulf %25, %31 : vector<32x64xf32>
    %cst_34 = arith.constant dense<0.000000e+00> : vector<32x8xf32>
    %33 = tpu.matmul %32, %26, %cst_34 {dimension_numbers = #tpu.dot_dimension_numbers<[1], [0], [0], [1], [0, 0, 1, 1], [], []>} : vector<32x64xf32>, vector<64x8xf32>, vector<32x8xf32> -> vector<32x8xf32>
    %34 = vector.broadcast %27 : vector<1x8xf32> to vector<32x8xf32>
    %35 = arith.addf %33, %34 : vector<32x8xf32>
    %cst_35 = arith.constant 0.000000e+00 : f32
    %36 = vector.broadcast %cst_35 : f32 to vector<32x8xf32>
    %37 = arith.maximumf %35, %36 : vector<32x8xf32>
    %cst_36 = arith.constant dense<0.000000e+00> : vector<1x32xf32>
    %38 = tpu.matmul %28, %37, %cst_36 {dimension_numbers = #tpu.dot_dimension_numbers<[1], [1], [0], [0], [0, 0, 1, 0], [], []>} : vector<1x8xf32>, vector<32x8xf32>, vector<1x32xf32> -> vector<1x32xf32>
    %39 = vector.broadcast %29 : vector<1x1xf32> to vector<1x32xf32>
    %40 = arith.addf %38, %39 : vector<1x32xf32>
    %c0_37 = arith.constant 0 : index
    %c0_38 = arith.constant 0 : index
    %41 = vector.load %arg3[%c0_37, %c0_38] : memref<32x8xf32, #tpu.memory_space<vmem>>, vector<32x8xf32>
    %42 = tpu.concatenate %41, %41, %41, %41, %41, %41, %41, %41 in 1 : vector<32x8xf32>, vector<32x8xf32>, vector<32x8xf32>, vector<32x8xf32>, vector<32x8xf32>, vector<32x8xf32>, vector<32x8xf32>, vector<32x8xf32> -> vector<32x64xf32>
    %43 = arith.mulf %25, %42 : vector<32x64xf32>
    %cst_39 = arith.constant dense<0.000000e+00> : vector<32x8xf32>
    %44 = tpu.matmul %43, %26, %cst_39 {dimension_numbers = #tpu.dot_dimension_numbers<[1], [0], [0], [1], [0, 0, 1, 1], [], []>} : vector<32x64xf32>, vector<64x8xf32>, vector<32x8xf32> -> vector<32x8xf32>
    %45 = vector.broadcast %27 : vector<1x8xf32> to vector<32x8xf32>
    %46 = arith.addf %44, %45 : vector<32x8xf32>
    %cst_40 = arith.constant 0.000000e+00 : f32
    %47 = vector.broadcast %cst_40 : f32 to vector<32x8xf32>
    %48 = arith.maximumf %46, %47 : vector<32x8xf32>
    %cst_41 = arith.constant dense<0.000000e+00> : vector<1x32xf32>
    %49 = tpu.matmul %28, %48, %cst_41 {dimension_numbers = #tpu.dot_dimension_numbers<[1], [1], [0], [0], [0, 0, 1, 0], [], []>} : vector<1x8xf32>, vector<32x8xf32>, vector<1x32xf32> -> vector<1x32xf32>
    %50 = vector.broadcast %29 : vector<1x1xf32> to vector<1x32xf32>
    %51 = arith.addf %49, %50 : vector<1x32xf32>
    %52 = tpu.concatenate %40, %51 in 1 : vector<1x32xf32>, vector<1x32xf32> -> vector<1x64xf32>
    %53 = arith.negf %52 : vector<1x64xf32>
    %54 = math.exp %53 : vector<1x64xf32>
    %cst_42 = arith.constant 1.000000e+00 : f32
    %55 = vector.broadcast %cst_42 : f32 to vector<1x64xf32>
    %56 = arith.addf %55, %54 : vector<1x64xf32>
    %57 = arith.divf %55, %56 : vector<1x64xf32>
    %cst_43 = arith.constant 0.000000e+00 : f32
    %58 = vector.broadcast %cst_43 : f32 to vector<1x64xf32>
    %59 = tpu.concatenate %57, %58 in 1 : vector<1x64xf32>, vector<1x64xf32> -> vector<1x128xf32>
    %60 = vector.shape_cast %59 : vector<1x128xf32> to vector<1x1x128xf32>
    %c0_44 = arith.constant 0 : index
    %c0_45 = arith.constant 0 : index
    %c0_46 = arith.constant 0 : index
    %61 = vector.load %arg16[%c0_44, %c0_45, %c0_46] : memref<1x1x128xf32, #tpu.memory_space<vmem>>, vector<1x1x128xf32>
    tpu.vector_store %arg16[%c0_44, %c0_45, %c0_46], %60 {strides = array<i32>} : memref<1x1x128xf32, #tpu.memory_space<vmem>>, vector<1x1x128xf32>,
    return
  }
  func.func @transform_0(%arg0: i32) -> (i32, i32) {
    %c0_i32 = arith.constant 0 : i32
    %c0_i32_0 = arith.constant 0 : i32
    return %arg0, %c0_i32 : i32, i32
  }
  func.func @transform_1(%arg0: i32) -> (i32, i32) {
    %c0_i32 = arith.constant 0 : i32
    %c0_i32_0 = arith.constant 0 : i32
    return %arg0, %c0_i32 : i32, i32
  }
  func.func @transform_2(%arg0: i32) -> (i32, i32) {
    %c0_i32 = arith.constant 0 : i32
    %c0_i32_0 = arith.constant 0 : i32
    return %arg0, %c0_i32 : i32, i32
  }
  func.func @transform_3(%arg0: i32) -> (i32, i32) {
    %c0_i32 = arith.constant 0 : i32
    %c0_i32_0 = arith.constant 0 : i32
    %c0_i32_1 = arith.constant 0 : i32
    return %c0_i32, %c0_i32_0 : i32, i32
  }
  func.func @transform_4(%arg0: i32) -> (i32, i32) {
    %c0_i32 = arith.constant 0 : i32
    %c0_i32_0 = arith.constant 0 : i32
    %c0_i32_1 = arith.constant 0 : i32
    return %c0_i32, %c0_i32_0 : i32, i32
  }
  func.func @transform_5(%arg0: i32) -> (i32, i32) {
    %c0_i32 = arith.constant 0 : i32
    %c0_i32_0 = arith.constant 0 : i32
    %c0_i32_1 = arith.constant 0 : i32
    return %c0_i32, %c0_i32_0 : i32, i32
  }
  func.func @transform_6(%arg0: i32) -> (i32, i32) {
    %c0_i32 = arith.constant 0 : i32
    %c0_i32_0 = arith.constant 0 : i32
    %c0_i32_1 = arith.constant 0 : i32
    return %c0_i32, %c0_i32_0 : i32, i32
  }
  func.func @transform_7(%arg0: i32) -> (i32, i32) {
    %c0_i32 = arith.constant 0 : i32
    %c0_i32_0 = arith.constant 0 : i32
    %c0_i32_1 = arith.constant 0 : i32
    return %c0_i32, %c0_i32_0 : i32, i32
  }
  func.func @transform_8(%arg0: i32) -> (i32, i32) {
    %c0_i32 = arith.constant 0 : i32
    %c0_i32_0 = arith.constant 0 : i32
    %c0_i32_1 = arith.constant 0 : i32
    return %c0_i32, %c0_i32_0 : i32, i32
  }
  func.func @transform_9(%arg0: i32) -> (i32, i32) {
    %c0_i32 = arith.constant 0 : i32
    %c0_i32_0 = arith.constant 0 : i32
    %c0_i32_1 = arith.constant 0 : i32
    return %c0_i32, %c0_i32_0 : i32, i32
  }
  func.func @transform_10(%arg0: i32) -> (i32, i32) {
    %c0_i32 = arith.constant 0 : i32
    %c0_i32_0 = arith.constant 0 : i32
    %c0_i32_1 = arith.constant 0 : i32
    return %c0_i32, %c0_i32_0 : i32, i32
  }
  func.func @transform_11(%arg0: i32) -> (i32, i32) {
    %c0_i32 = arith.constant 0 : i32
    %c0_i32_0 = arith.constant 0 : i32
    %c0_i32_1 = arith.constant 0 : i32
    return %c0_i32, %c0_i32_0 : i32, i32
  }
  func.func @transform_12(%arg0: i32) -> (i32, i32) {
    %c0_i32 = arith.constant 0 : i32
    %c0_i32_0 = arith.constant 0 : i32
    %c0_i32_1 = arith.constant 0 : i32
    return %c0_i32, %c0_i32_0 : i32, i32
  }
  func.func @transform_13(%arg0: i32) -> (i32, i32) {
    %c0_i32 = arith.constant 0 : i32
    %c0_i32_0 = arith.constant 0 : i32
    %c0_i32_1 = arith.constant 0 : i32
    return %c0_i32, %c0_i32_0 : i32, i32
  }
  func.func @transform_14(%arg0: i32) -> (i32, i32) {
    %c0_i32 = arith.constant 0 : i32
    %c0_i32_0 = arith.constant 0 : i32
    %c0_i32_1 = arith.constant 0 : i32
    return %c0_i32, %c0_i32_0 : i32, i32
  }
  func.func @transform_15(%arg0: i32) -> (i32, i32, i32) {
    %c0_i32 = arith.constant 0 : i32
    %c0_i32_0 = arith.constant 0 : i32
    %c0_i32_1 = arith.constant 0 : i32
    return %arg0, %c0_i32, %c0_i32_0 : i32, i32, i32
  }
}

</mosaic_0001>

<llo_original>
// kernel: tpu_custom_call.1
$region0: #{tpu_custom_call.1}
  #allocation0 [shape = 'u32[]', space=smem, size = 0x4, offset = 0x4, fixed_abs, tag = 'smem constant byte address 0x4 - core index']
  #allocation1 [shape = 'u32[144,128]{1,0:T(1,128)}', space=vmem, size = 0x12000, scoped, tag = 'internal scratch']
  #allocation2 [shape = 'f32[1,1]{1,0:T(1,128)S(1)}', space=vmem, size = 0x200, scoped, tag = 'scoped memory for tpu_custom_call.1']
  %s0 = inlined_call_operand.vmem [shape: f32[32,8], index: 0, kind: input, shape index: {}]
  %s1 = inlined_call_operand.vmem [shape: f32[32,8], index: 1, kind: input, shape index: {}]
  %s2 = inlined_call_operand.vmem [shape: f32[32,8], index: 2, kind: input, shape index: {}]
  %s3 = inlined_call_operand.vmem [shape: f32[32,32], index: 3, kind: input, shape index: {}]
  %s4 = inlined_call_operand.vmem [shape: f32[8,32], index: 4, kind: input, shape index: {}]
  %s5 = inlined_call_operand.vmem [shape: f32[1,32], index: 5, kind: input, shape index: {}]
  %s6 = inlined_call_operand.vmem [shape: f32[32,32], index: 6, kind: input, shape index: {}]
  %s7 = inlined_call_operand.vmem [shape: f32[1,32], index: 7, kind: input, shape index: {}]
  %s8 = inlined_call_operand.vmem [shape: f32[32,16], index: 8, kind: input, shape index: {}]
  %s9 = inlined_call_operand.vmem [shape: f32[1,16], index: 9, kind: input, shape index: {}]
  %s10 = inlined_call_operand.vmem [shape: f32[16,64], index: 10, kind: input, shape index: {}]
  %s11 = inlined_call_operand.vmem [shape: f32[1,8], index: 11, kind: input, shape index: {}]
  %s12 = inlined_call_operand.vmem [shape: f32[1,8], index: 12, kind: input, shape index: {}]
  %s13 = inlined_call_operand.<no memory space> [shape: f32[1,1], index: 13, kind: input, shape index: {}]
  %s14 = inlined_call_operand.vmem [shape: f32[64,8], index: 14, kind: input, shape index: {}]
  %s15 = inlined_call_operand.hbm [shape: f32[1,1,128], index: 15, kind: output, shape index: {}]
  %s16 = sld [smem:[#allocation0]]
  $region70: #{tpu_custom_call.1} parent=0
    _
  %s18 = ssub.s32 1, %s16
  %s19 = scalar_select 0, %s18, %s16
  %v20 = vstv %s13
  %21 = vst [vmem:[#allocation2] sm:$0x1] %v20
  $region1: #{tpu_custom_call.1} parent=0
    #allocation3 [shape = 'u8[512]{0}', space=vmem, size = 0x400, scoped, tag = 'output window, operand 0, single buffered']
    #allocation4 [shape = 's32[1]{0}', space=sflag, size = 0x4, scoped, tag = 'scoped memory for tpu_custom_call.1']
    %22 = vsyncpa [#allocation4], 0
    // Predicated region
    $region2: #{tpu_custom_call.1} parent=1 // pred_check
      _
    $region3: #{tpu_custom_call.1} parent=1 // pred_check_branch
      %24 = sbr.rel (0) target = $region5
    $region4: #{tpu_custom_call.1} parent=1 // pred_region
      _
    $region5: #{tpu_custom_call.1} parent=1 // pred_fallthru
      _
    // Predicated region
    $region6: #{tpu_custom_call.1} parent=1 // pred_check
      _
    $region7: #{tpu_custom_call.1} parent=1 // pred_check_branch
      %26 = sbr.rel (0) target = $region9
    $region8: #{tpu_custom_call.1} parent=1 // pred_region
      _
    $region9: #{tpu_custom_call.1} parent=1 // pred_fallthru
      _
    // Predicated region
    $region10: #{tpu_custom_call.1} parent=1 // pred_check
      _
    $region11: #{tpu_custom_call.1} parent=1 // pred_check_branch
      %28 = sbr.rel (0) target = $region13
    $region12: #{tpu_custom_call.1} parent=1 // pred_region
      _
    $region13: #{tpu_custom_call.1} parent=1 // pred_fallthru
      _
    // Predicated region
    $region14: #{tpu_custom_call.1} parent=1 // pred_check
      _
    $region15: #{tpu_custom_call.1} parent=1 // pred_check_branch
      %30 = sbr.rel (0) target = $region17
    $region16: #{tpu_custom_call.1} parent=1 // pred_region
      _
    $region17: #{tpu_custom_call.1} parent=1 // pred_fallthru
      _
    // Predicated region
    $region18: #{tpu_custom_call.1} parent=1 // pred_check
      _
    $region19: #{tpu_custom_call.1} parent=1 // pred_check_branch
      %32 = sbr.rel (0) target = $region21
    $region20: #{tpu_custom_call.1} parent=1 // pred_region
      _
    $region21: #{tpu_custom_call.1} parent=1 // pred_fallthru
      _
    // Predicated region
    $region22: #{tpu_custom_call.1} parent=1 // pred_check
      _
    $region23: #{tpu_custom_call.1} parent=1 // pred_check_branch
      %34 = sbr.rel (0) target = $region25
    $region24: #{tpu_custom_call.1} parent=1 // pred_region
      _
    $region25: #{tpu_custom_call.1} parent=1 // pred_fallthru
      _
    // Predicated region
    $region26: #{tpu_custom_call.1} parent=1 // pred_check
      _
    $region27: #{tpu_custom_call.1} parent=1 // pred_check_branch
      %36 = sbr.rel (0) target = $region29
    $region28: #{tpu_custom_call.1} parent=1 // pred_region
      _
    $region29: #{tpu_custom_call.1} parent=1 // pred_fallthru
      _
    // Predicated region
    $region30: #{tpu_custom_call.1} parent=1 // pred_check
      _
    $region31: #{tpu_custom_call.1} parent=1 // pred_check_branch
      %38 = sbr.rel (0) target = $region33
    $region32: #{tpu_custom_call.1} parent=1 // pred_region
      _
    $region33: #{tpu_custom_call.1} parent=1 // pred_fallthru
      _
    // Predicated region
    $region34: #{tpu_custom_call.1} parent=1 // pred_check
      _
    $region35: #{tpu_custom_call.1} parent=1 // pred_check_branch
      %40 = sbr.rel (0) target = $region37
    $region36: #{tpu_custom_call.1} parent=1 // pred_region
      _
    $region37: #{tpu_custom_call.1} parent=1 // pred_fallthru
      _
    // Predicated region
    $region38: #{tpu_custom_call.1} parent=1 // pred_check
      _
    $region39: #{tpu_custom_call.1} parent=1 // pred_check_branch
      %42 = sbr.rel (0) target = $region41
    $region40: #{tpu_custom_call.1} parent=1 // pred_region
      _
    $region41: #{tpu_custom_call.1} parent=1 // pred_fallthru
      _
    // Predicated region
    $region42: #{tpu_custom_call.1} parent=1 // pred_check
      _
    $region43: #{tpu_custom_call.1} parent=1 // pred_check_branch
      %44 = sbr.rel (0) target = $region45
    $region44: #{tpu_custom_call.1} parent=1 // pred_region
      _
    $region45: #{tpu_custom_call.1} parent=1 // pred_fallthru
      _
    // Predicated region
    $region46: #{tpu_custom_call.1} parent=1 // pred_check
      _
    $region47: #{tpu_custom_call.1} parent=1 // pred_check_branch
      %46 = sbr.rel (0) target = $region49
    $region48: #{tpu_custom_call.1} parent=1 // pred_region
      _
    $region49: #{tpu_custom_call.1} parent=1 // pred_fallthru
      _
    // Predicated region
    $region50: #{tpu_custom_call.1} parent=1 // pred_check
      _
    $region51: #{tpu_custom_call.1} parent=1 // pred_check_branch
      %48 = sbr.rel (0) target = $region53
    $region52: #{tpu_custom_call.1} parent=1 // pred_region
      _
    $region53: #{tpu_custom_call.1} parent=1 // pred_fallthru
      _
    // Predicated region
    $region54: #{tpu_custom_call.1} parent=1 // pred_check
      _
    $region55: #{tpu_custom_call.1} parent=1 // pred_check_branch
      %50 = sbr.rel (0) target = $region57
    $region56: #{tpu_custom_call.1} parent=1 // pred_region
      _
    $region57: #{tpu_custom_call.1} parent=1 // pred_fallthru
      _
    // Predicated region
    $region58: #{tpu_custom_call.1} parent=1 // pred_check
      _
    $region59: #{tpu_custom_call.1} parent=1 // pred_check_branch
      %52 = sbr.rel (0) target = $region61
    $region60: #{tpu_custom_call.1} parent=1 // pred_region
      _
    $region61: #{tpu_custom_call.1} parent=1 // pred_fallthru
      _
    %v53 = vld [vmem:[%s0] sm:$0xff]
    %v54 = vld [vmem:[%s0 + $0x8] sm:$0xff]
    %v55 = vld [vmem:[%s0 + $0x10] sm:$0xff]
    %v56 = vld [vmem:[%s0 + $0x18] sm:$0xff]
    %v57 = vld [vmem:[%s4] sm:$0xff]
    %v58 = vld [vmem:[%s5] sm:$0x1]
    %v60 = vlaneseq
    %v61 = vshrl.u32 %v60, 7
    %v62 = vsub.s32 0, %v61
    %v63 = vrot.slane %v58, %v62
    %vm65 = vcmask 64512
    %v67 = vsel %vm65, %v53, 0
    %v70 = vsel %vm65, %v54, 0
    %v73 = vsel %vm65, %v55, 0
    %v76 = vsel %vm65, %v56, 0
    %78 = vmatprep.subr.mxu0 0.0
    %79 = vmatpush1.msra.mxu0 %v57
    %80 = vmatprep.subr.mxu0 0.0
    %81 = vmatpush1.msra.mxu0 0.0
    %82 = vmatprep.subr.mxu0 0.0
    %83 = vmatpush1.msra.mxu0 0.0
    %84 = vmatprep.subr.mxu0 0.0
    %85 = vmatpush1.msra.mxu0 0.0
    %86 = vmatprep.subr.mxu0 0.0
    %87 = vmatpush1.msra.mxu0 0.0
    %88 = vmatprep.subr.mxu0 0.0
    %89 = vmatpush1.msra.mxu0 0.0
    %90 = vmatprep.subr.mxu0 0.0
    %91 = vmatpush1.msra.mxu0 0.0
    %92 = vmatprep.subr.mxu0 0.0
    %93 = vmatpush1.msra.mxu0 0.0
    %94 = vmatprep.subr.mxu0 0.0
    %95 = vmatpush1.msra.mxu0 0.0
    %96 = vmatprep.subr.mxu0 0.0
    %97 = vmatpush1.msra.mxu0 0.0
    %98 = vmatprep.subr.mxu0 0.0
    %99 = vmatpush1.msra.mxu0 0.0
    %100 = vmatprep.subr.mxu0 0.0
    %101 = vmatpush1.msra.mxu0 0.0
    %102 = vmatprep.subr.mxu0 0.0
    %103 = vmatpush1.msra.mxu0 0.0
    %104 = vmatprep.subr.mxu0 0.0
    %105 = vmatpush1.msra.mxu0 0.0
    %106 = vmatprep.subr.mxu0 0.0
    %107 = vmatpush1.msra.mxu0 0.0
    %108 = vmatprep.subr.mxu0 0.0
    %109 = vmatpush1.msra.mxu0 0.0
    %110 = vmatprep.subr.mxu0 0.0
    %111 = vmatpush1.msra.mxu0 0.0
    %112 = vmatprep.subr.mxu0 0.0
    %113 = vmatpush1.msra.mxu0 0.0
    %114 = vmatprep.subr.mxu0 0.0
    %115 = vmatpush1.msra.mxu0 0.0
    %116 = vmatprep.subr.mxu0 0.0
    %117 = vmatpush1.msra.mxu0 0.0
    %118 = vmatprep.subr.mxu0 0.0
    %119 = vmatpush1.msra.mxu0 0.0
    %120 = vmatprep.subr.mxu0 0.0
    %121 = vmatpush1.msra.mxu0 0.0
    %122 = vmatprep.subr.mxu0 0.0
    %123 = vmatpush1.msra.mxu0 0.0
    %124 = vmatprep.subr.mxu0 0.0
    %125 = vmatpush1.msra.mxu0 0.0
    %126 = vmatprep.subr.mxu0 0.0
    %127 = vmatpush1.msra.mxu0 0.0
    %128 = vmatprep.subr.mxu0 0.0
    %129 = vmatpush1.msra.mxu0 0.0
    %130 = vmatprep.subr.mxu0 0.0
    %131 = vmatpush1.msra.mxu0 0.0
    %132 = vmatprep.subr.mxu0 0.0
    %133 = vmatpush1.msra.mxu0 0.0
    %134 = vmatprep.subr.mxu0 0.0
    %135 = vmatpush1.msra.mxu0 0.0
    %136 = vmatprep.subr.mxu0 0.0
    %137 = vmatpush1.msra.mxu0 0.0
    %138 = vmatprep.subr.mxu0 0.0
    %139 = vmatpush1.msra.mxu0 0.0
    %140 = vmatprep.subr.mxu0 0.0
    %141 = vmatpush1.msra.mxu0 0.0
    %142 = vmatprep.mubr.f32.mxu0 0.0
    %143 = vmatmul.mubr.f32.gmra.mrb[0].mxu0 %v67
    %v144 = vpop.f32.mrb[0].mxu0
    %v145 = vadd.f32 %v63, %v144
    %v146 = vpop.f32.mrb[0].mxu0
    %147 = vmatprep.mubr.f32.mxu0 0.0
    %148 = vmatmul.mubr.f32.gmra.mrb[0].mxu0 %v70
    %v149 = vpop.f32.mrb[0].mxu0
    %v150 = vadd.f32 %v63, %v149
    %v151 = vpop.f32.mrb[0].mxu0
    %152 = vmatprep.mubr.f32.mxu0 0.0
    %153 = vmatmul.mubr.f32.gmra.mrb[0].mxu0 %v73
    %v154 = vpop.f32.mrb[0].mxu0
    %v155 = vadd.f32 %v63, %v154
    %v156 = vpop.f32.mrb[0].mxu0
    %157 = vmatprep.mubr.f32.mxu0 0.0
    %158 = vmatmul.mubr.f32.gmra.mrb[0].mxu0 %v76
    %v159 = vpop.f32.mrb[0].mxu0
    %v160 = vadd.f32 %v63, %v159
    %v161 = vpop.f32.mrb[0].mxu0
    %162 = vdwg.mxu0
    %v163 = vmax.f32 %v145, 0.0
    %v164 = vmax.f32 %v150, 0.0
    %v165 = vmax.f32 %v155, 0.0
    %v166 = vmax.f32 %v160, 0.0
    %v167 = vld [vmem:[%s6] sm:$0xff]
    %v168 = vld [vmem:[%s6 + $0x8] sm:$0xff]
    %v169 = vld [vmem:[%s6 + $0x10] sm:$0xff]
    %v170 = vld [vmem:[%s6 + $0x18] sm:$0xff]
    %v171 = vld [vmem:[%s7] sm:$0x1]
    %v173 = vlaneseq
    %v174 = vshrl.u32 %v173, 7
    %v175 = vsub.s32 0, %v174
    %v176 = vrot.slane %v171, %v175
    %vm178 = vcmask 261120
    %v180 = vsel %vm178, %v163, 0
    %v183 = vsel %vm178, %v164, 0
    %v186 = vsel %vm178, %v165, 0
    %v189 = vsel %vm178, %v166, 0
    %191 = vmatprep.subr.mxu0 0.0
    %192 = vmatpush1.msra.mxu0 %v167
    %193 = vmatprep.subr.mxu0 0.0
    %194 = vmatpush1.msra.mxu0 %v168
    %195 = vmatprep.subr.mxu0 0.0
    %196 = vmatpush1.msra.mxu0 %v169
    %197 = vmatprep.subr.mxu0 0.0
    %198 = vmatpush1.msra.mxu0 %v170
    %199 = vmatprep.subr.mxu0 0.0
    %200 = vmatpush1.msra.mxu0 0.0
    %201 = vmatprep.subr.mxu0 0.0
    %202 = vmatpush1.msra.mxu0 0.0
    %203 = vmatprep.subr.mxu0 0.0
    %204 = vmatpush1.msra.mxu0 0.0
    %205 = vmatprep.subr.mxu0 0.0
    %206 = vmatpush1.msra.mxu0 0.0
    %207 = vmatprep.subr.mxu0 0.0
    %208 = vmatpush1.msra.mxu0 0.0
    %209 = vmatprep.subr.mxu0 0.0
    %210 = vmatpush1.msra.mxu0 0.0
    %211 = vmatprep.subr.mxu0 0.0
    %212 = vmatpush1.msra.mxu0 0.0
    %213 = vmatprep.subr.mxu0 0.0
    %214 = vmatpush1.msra.mxu0 0.0
    %215 = vmatprep.subr.mxu0 0.0
    %216 = vmatpush1.msra.mxu0 0.0
    %217 = vmatprep.subr.mxu0 0.0
    %218 = vmatpush1.msra.mxu0 0.0
    %219 = vmatprep.subr.mxu0 0.0
    %220 = vmatpush1.msra.mxu0 0.0
    %221 = vmatprep.subr.mxu0 0.0
    %222 = vmatpush1.msra.mxu0 0.0
    %223 = vmatprep.subr.mxu0 0.0
    %224 = vmatpush1.msra.mxu0 0.0
    %225 = vmatprep.subr.mxu0 0.0
    %226 = vmatpush1.msra.mxu0 0.0
    %227 = vmatprep.subr.mxu0 0.0
    %228 = vmatpush1.msra.mxu0 0.0
    %229 = vmatprep.subr.mxu0 0.0
    %230 = vmatpush1.msra.mxu0 0.0
    %231 = vmatprep.subr.mxu0 0.0
    %232 = vmatpush1.msra.mxu0 0.0
    %233 = vmatprep.subr.mxu0 0.0
    %234 = vmatpush1.msra.mxu0 0.0
    %235 = vmatprep.subr.mxu0 0.0
    %236 = vmatpush1.msra.mxu0 0.0
    %237 = vmatprep.subr.mxu0 0.0
    %238 = vmatpush1.msra.mxu0 0.0
    %239 = vmatprep.subr.mxu0 0.0
    %240 = vmatpush1.msra.mxu0 0.0
    %241 = vmatprep.subr.mxu0 0.0
    %242 = vmatpush1.msra.mxu0 0.0
    %243 = vmatprep.subr.mxu0 0.0
    %244 = vmatpush1.msra.mxu0 0.0
    %245 = vmatprep.subr.mxu0 0.0
    %246 = vmatpush1.msra.mxu0 0.0
    %247 = vmatprep.subr.mxu0 0.0
    %248 = vmatpush1.msra.mxu0 0.0
    %249 = vmatprep.subr.mxu0 0.0
    %250 = vmatpush1.msra.mxu0 0.0
    %251 = vmatprep.subr.mxu0 0.0
    %252 = vmatpush1.msra.mxu0 0.0
    %253 = vmatprep.subr.mxu0 0.0
    %254 = vmatpush1.msra.mxu0 0.0
    %255 = vmatprep.mubr.f32.mxu0 0.0
    %256 = vmatmul.mubr.f32.gmra.mrb[0].mxu0 %v180
    %v257 = vpop.f32.mrb[0].mxu0
    %v258 = vadd.f32 %v176, %v257
    %v259 = vpop.f32.mrb[0].mxu0
    %260 = vmatprep.mubr.f32.mxu0 0.0
    %261 = vmatmul.mubr.f32.gmra.mrb[0].mxu0 %v183
    %v262 = vpop.f32.mrb[0].mxu0
    %v263 = vadd.f32 %v176, %v262
    %v264 = vpop.f32.mrb[0].mxu0
    %265 = vmatprep.mubr.f32.mxu0 0.0
    %266 = vmatmul.mubr.f32.gmra.mrb[0].mxu0 %v186
    %v267 = vpop.f32.mrb[0].mxu0
    %v268 = vadd.f32 %v176, %v267
    %v269 = vpop.f32.mrb[0].mxu0
    %270 = vmatprep.mubr.f32.mxu0 0.0
    %271 = vmatmul.mubr.f32.gmra.mrb[0].mxu0 %v189
    %v272 = vpop.f32.mrb[0].mxu0
    %v273 = vadd.f32 %v176, %v272
    %v274 = vpop.f32.mrb[0].mxu0
    %275 = vdwg.mxu0
    %v276 = vmax.f32 %v258, 0.0
    %v277 = vmax.f32 %v263, 0.0
    %v278 = vmax.f32 %v268, 0.0
    %v279 = vmax.f32 %v273, 0.0
    %v280 = vld [vmem:[%s3] sm:$0xff]
    %v281 = vld [vmem:[%s3 + $0x8] sm:$0xff]
    %v282 = vld [vmem:[%s3 + $0x10] sm:$0xff]
    %v283 = vld [vmem:[%s3 + $0x18] sm:$0xff]
    %v285 = vsel %vm178, %v280, 0
    %v288 = vsel %vm178, %v281, 0
    %v291 = vsel %vm178, %v282, 0
    %v294 = vsel %vm178, %v283, 0
    %296 = vmatprep.subr.mxu0 0.0
    %297 = vmatpush1.msra.mxu0 %v276
    %298 = vmatprep.subr.mxu0 0.0
    %299 = vmatpush1.msra.mxu0 %v277
    %300 = vmatprep.subr.mxu0 0.0
    %301 = vmatpush1.msra.mxu0 %v278
    %302 = vmatprep.subr.mxu0 0.0
    %303 = vmatpush1.msra.mxu0 %v279
    %304 = vmatprep.subr.mxu0 0.0
    %305 = vmatpush1.msra.mxu0 0.0
    %306 = vmatprep.subr.mxu0 0.0
    %307 = vmatpush1.msra.mxu0 0.0
    %308 = vmatprep.subr.mxu0 0.0
    %309 = vmatpush1.msra.mxu0 0.0
    %310 = vmatprep.subr.mxu0 0.0
    %311 = vmatpush1.msra.mxu0 0.0
    %312 = vmatprep.subr.mxu0 0.0
    %313 = vmatpush1.msra.mxu0 0.0
    %314 = vmatprep.subr.mxu0 0.0
    %315 = vmatpush1.msra.mxu0 0.0
    %316 = vmatprep.subr.mxu0 0.0
    %317 = vmatpush1.msra.mxu0 0.0
    %318 = vmatprep.subr.mxu0 0.0
    %319 = vmatpush1.msra.mxu0 0.0
    %320 = vmatprep.subr.mxu0 0.0
    %321 = vmatpush1.msra.mxu0 0.0
    %322 = vmatprep.subr.mxu0 0.0
    %323 = vmatpush1.msra.mxu0 0.0
    %324 = vmatprep.subr.mxu0 0.0
    %325 = vmatpush1.msra.mxu0 0.0
    %326 = vmatprep.subr.mxu0 0.0
    %327 = vmatpush1.msra.mxu0 0.0
    %328 = vmatprep.subr.mxu0 0.0
    %329 = vmatpush1.msra.mxu0 0.0
    %330 = vmatprep.subr.mxu0 0.0
    %331 = vmatpush1.msra.mxu0 0.0
    %332 = vmatprep.subr.mxu0 0.0
    %333 = vmatpush1.msra.mxu0 0.0
    %334 = vmatprep.subr.mxu0 0.0
    %335 = vmatpush1.msra.mxu0 0.0
    %336 = vmatprep.subr.mxu0 0.0
    %337 = vmatpush1.msra.mxu0 0.0
    %338 = vmatprep.subr.mxu0 0.0
    %339 = vmatpush1.msra.mxu0 0.0
    %340 = vmatprep.subr.mxu0 0.0
    %341 = vmatpush1.msra.mxu0 0.0
    %342 = vmatprep.subr.mxu0 0.0
    %343 = vmatpush1.msra.mxu0 0.0
    %344 = vmatprep.subr.mxu0 0.0
    %345 = vmatpush1.msra.mxu0 0.0
    %346 = vmatprep.subr.mxu0 0.0
    %347 = vmatpush1.msra.mxu0 0.0
    %348 = vmatprep.subr.mxu0 0.0
    %349 = vmatpush1.msra.mxu0 0.0
    %350 = vmatprep.subr.mxu0 0.0
    %351 = vmatpush1.msra.mxu0 0.0
    %352 = vmatprep.subr.mxu0 0.0
    %353 = vmatpush1.msra.mxu0 0.0
    %354 = vmatprep.subr.mxu0 0.0
    %355 = vmatpush1.msra.mxu0 0.0
    %356 = vmatprep.subr.mxu0 0.0
    %357 = vmatpush1.msra.mxu0 0.0
    %358 = vmatprep.subr.mxu0 0.0
    %359 = vmatpush1.msra.mxu0 0.0
    %360 = vmatprep.mubr.f32.mxu0 0.0
    %361 = vmatmul.mubr.f32.gmra.mrb[0].mxu0 %v285
    %v362 = vpop.f32.mrb[0].mxu0
    %v363 = vadd.f32 0.0, %v362
    %v364 = vpop.f32.mrb[0].mxu0
    %365 = vmatprep.mubr.f32.mxu0 0.0
    %366 = vmatmul.mubr.f32.gmra.mrb[0].mxu0 %v288
    %v367 = vpop.f32.mrb[0].mxu0
    %v368 = vadd.f32 0.0, %v367
    %v369 = vpop.f32.mrb[0].mxu0
    %370 = vmatprep.mubr.f32.mxu0 0.0
    %371 = vmatmul.mubr.f32.gmra.mrb[0].mxu0 %v291
    %v372 = vpop.f32.mrb[0].mxu0
    %v373 = vadd.f32 0.0, %v372
    %v374 = vpop.f32.mrb[0].mxu0
    %375 = vmatprep.mubr.f32.mxu0 0.0
    %376 = vmatmul.mubr.f32.gmra.mrb[0].mxu0 %v294
    %v377 = vpop.f32.mrb[0].mxu0
    %v378 = vadd.f32 0.0, %v377
    %v379 = vpop.f32.mrb[0].mxu0
    %380 = vdwg.mxu0
    %v381 = vld [vmem:[%s8] sm:$0xff]
    %v382 = vld [vmem:[%s8 + $0x8] sm:$0xff]
    %v383 = vld [vmem:[%s8 + $0x10] sm:$0xff]
    %v384 = vld [vmem:[%s8 + $0x18] sm:$0xff]
    %v385 = vld [vmem:[%s9] sm:$0x1]
    %v387 = vlaneseq
    %v388 = vshrl.u32 %v387, 7
    %v389 = vsub.s32 0, %v388
    %v390 = vrot.slane %v385, %v389
    %v393 = vsel %vm178, %v363, 0
    %v396 = vsel %vm178, %v368, 0
    %v399 = vsel %vm178, %v373, 0
    %v402 = vsel %vm178, %v378, 0
    %404 = vmatprep.subr.mxu0 0.0
    %405 = vmatpush1.msra.mxu0 %v381
    %406 = vmatprep.subr.mxu0 0.0
    %407 = vmatpush1.msra.mxu0 %v382
    %408 = vmatprep.subr.mxu0 0.0
    %409 = vmatpush1.msra.mxu0 %v383
    %410 = vmatprep.subr.mxu0 0.0
    %411 = vmatpush1.msra.mxu0 %v384
    %412 = vmatprep.subr.mxu0 0.0
    %413 = vmatpush1.msra.mxu0 0.0
    %414 = vmatprep.subr.mxu0 0.0
    %415 = vmatpush1.msra.mxu0 0.0
    %416 = vmatprep.subr.mxu0 0.0
    %417 = vmatpush1.msra.mxu0 0.0
    %418 = vmatprep.subr.mxu0 0.0
    %419 = vmatpush1.msra.mxu0 0.0
    %420 = vmatprep.subr.mxu0 0.0
    %421 = vmatpush1.msra.mxu0 0.0
    %422 = vmatprep.subr.mxu0 0.0
    %423 = vmatpush1.msra.mxu0 0.0
    %424 = vmatprep.subr.mxu0 0.0
    %425 = vmatpush1.msra.mxu0 0.0
    %426 = vmatprep.subr.mxu0 0.0
    %427 = vmatpush1.msra.mxu0 0.0
    %428 = vmatprep.subr.mxu0 0.0
    %429 = vmatpush1.msra.mxu0 0.0
    %430 = vmatprep.subr.mxu0 0.0
    %431 = vmatpush1.msra.mxu0 0.0
    %432 = vmatprep.subr.mxu0 0.0
    %433 = vmatpush1.msra.mxu0 0.0
    %434 = vmatprep.subr.mxu0 0.0
    %435 = vmatpush1.msra.mxu0 0.0
    %436 = vmatprep.subr.mxu0 0.0
    %437 = vmatpush1.msra.mxu0 0.0
    %438 = vmatprep.subr.mxu0 0.0
    %439 = vmatpush1.msra.mxu0 0.0
    %440 = vmatprep.subr.mxu0 0.0
    %441 = vmatpush1.msra.mxu0 0.0
    %442 = vmatprep.subr.mxu0 0.0
    %443 = vmatpush1.msra.mxu0 0.0
    %444 = vmatprep.subr.mxu0 0.0
    %445 = vmatpush1.msra.mxu0 0.0
    %446 = vmatprep.subr.mxu0 0.0
    %447 = vmatpush1.msra.mxu0 0.0
    %448 = vmatprep.subr.mxu0 0.0
    %449 = vmatpush1.msra.mxu0 0.0
    %450 = vmatprep.subr.mxu0 0.0
    %451 = vmatpush1.msra.mxu0 0.0
    %452 = vmatprep.subr.mxu0 0.0
    %453 = vmatpush1.msra.mxu0 0.0
    %454 = vmatprep.subr.mxu0 0.0
    %455 = vmatpush1.msra.mxu0 0.0
    %456 = vmatprep.subr.mxu0 0.0
    %457 = vmatpush1.msra.mxu0 0.0
    %458 = vmatprep.subr.mxu0 0.0
    %459 = vmatpush1.msra.mxu0 0.0
    %460 = vmatprep.subr.mxu0 0.0
    %461 = vmatpush1.msra.mxu0 0.0
    %462 = vmatprep.subr.mxu0 0.0
    %463 = vmatpush1.msra.mxu0 0.0
    %464 = vmatprep.subr.mxu0 0.0
    %465 = vmatpush1.msra.mxu0 0.0
    %466 = vmatprep.subr.mxu0 0.0
    %467 = vmatpush1.msra.mxu0 0.0
    %468 = vmatprep.mubr.f32.mxu0 0.0
    %469 = vmatmul.mubr.f32.gmra.mrb[0].mxu0 %v393
    %v470 = vpop.f32.mrb[0].mxu0
    %v471 = vadd.f32 %v390, %v470
    %v472 = vpop.f32.mrb[0].mxu0
    %473 = vmatprep.mubr.f32.mxu0 0.0
    %474 = vmatmul.mubr.f32.gmra.mrb[0].mxu0 %v396
    %v475 = vpop.f32.mrb[0].mxu0
    %v476 = vadd.f32 %v390, %v475
    %v477 = vpop.f32.mrb[0].mxu0
    %478 = vmatprep.mubr.f32.mxu0 0.0
    %479 = vmatmul.mubr.f32.gmra.mrb[0].mxu0 %v399
    %v480 = vpop.f32.mrb[0].mxu0
    %v481 = vadd.f32 %v390, %v480
    %v482 = vpop.f32.mrb[0].mxu0
    %483 = vmatprep.mubr.f32.mxu0 0.0
    %484 = vmatmul.mubr.f32.gmra.mrb[0].mxu0 %v402
    %v485 = vpop.f32.mrb[0].mxu0
    %v486 = vadd.f32 %v390, %v485
    %v487 = vpop.f32.mrb[0].mxu0
    %488 = vdwg.mxu0
    %v489 = vmax.f32 %v471, 0.0
    %v490 = vmax.f32 %v476, 0.0
    %v491 = vmax.f32 %v481, 0.0
    %v492 = vmax.f32 %v486, 0.0
    %v493 = vld [vmem:[%s10] sm:$0xff]
    %v494 = vld [vmem:[%s10 + $0x8] sm:$0xff]
    %vm495 = vcmask 130048
    %v497 = vsel %vm495, %v489, 0
    %v500 = vsel %vm495, %v490, 0
    %v503 = vsel %vm495, %v491, 0
    %v506 = vsel %vm495, %v492, 0
    %508 = vmatprep.subr.mxu0 0.0
    %509 = vmatpush1.msra.mxu0 %v493
    %510 = vmatprep.subr.mxu0 0.0
    %511 = vmatpush1.msra.mxu0 %v494
    %512 = vmatprep.subr.mxu0 0.0
    %513 = vmatpush1.msra.mxu0 0.0
    %514 = vmatprep.subr.mxu0 0.0
    %515 = vmatpush1.msra.mxu0 0.0
    %516 = vmatprep.subr.mxu0 0.0
    %517 = vmatpush1.msra.mxu0 0.0
    %518 = vmatprep.subr.mxu0 0.0
    %519 = vmatpush1.msra.mxu0 0.0
    %520 = vmatprep.subr.mxu0 0.0
    %521 = vmatpush1.msra.mxu0 0.0
    %522 = vmatprep.subr.mxu0 0.0
    %523 = vmatpush1.msra.mxu0 0.0
    %524 = vmatprep.subr.mxu0 0.0
    %525 = vmatpush1.msra.mxu0 0.0
    %526 = vmatprep.subr.mxu0 0.0
    %527 = vmatpush1.msra.mxu0 0.0
    %528 = vmatprep.subr.mxu0 0.0
    %529 = vmatpush1.msra.mxu0 0.0
    %530 = vmatprep.subr.mxu0 0.0
    %531 = vmatpush1.msra.mxu0 0.0
    %532 = vmatprep.subr.mxu0 0.0
    %533 = vmatpush1.msra.mxu0 0.0
    %534 = vmatprep.subr.mxu0 0.0
    %535 = vmatpush1.msra.mxu0 0.0
    %536 = vmatprep.subr.mxu0 0.0
    %537 = vmatpush1.msra.mxu0 0.0
    %538 = vmatprep.subr.mxu0 0.0
    %539 = vmatpush1.msra.mxu0 0.0
    %540 = vmatprep.subr.mxu0 0.0
    %541 = vmatpush1.msra.mxu0 0.0
    %542 = vmatprep.subr.mxu0 0.0
    %543 = vmatpush1.msra.mxu0 0.0
    %544 = vmatprep.subr.mxu0 0.0
    %545 = vmatpush1.msra.mxu0 0.0
    %546 = vmatprep.subr.mxu0 0.0
    %547 = vmatpush1.msra.mxu0 0.0
    %548 = vmatprep.subr.mxu0 0.0
    %549 = vmatpush1.msra.mxu0 0.0
    %550 = vmatprep.subr.mxu0 0.0
    %551 = vmatpush1.msra.mxu0 0.0
    %552 = vmatprep.subr.mxu0 0.0
    %553 = vmatpush1.msra.mxu0 0.0
    %554 = vmatprep.subr.mxu0 0.0
    %555 = vmatpush1.msra.mxu0 0.0
    %556 = vmatprep.subr.mxu0 0.0
    %557 = vmatpush1.msra.mxu0 0.0
    %558 = vmatprep.subr.mxu0 0.0
    %559 = vmatpush1.msra.mxu0 0.0
    %560 = vmatprep.subr.mxu0 0.0
    %561 = vmatpush1.msra.mxu0 0.0
    %562 = vmatprep.subr.mxu0 0.0
    %563 = vmatpush1.msra.mxu0 0.0
    %564 = vmatprep.subr.mxu0 0.0
    %565 = vmatpush1.msra.mxu0 0.0
    %566 = vmatprep.subr.mxu0 0.0
    %567 = vmatpush1.msra.mxu0 0.0
    %568 = vmatprep.subr.mxu0 0.0
    %569 = vmatpush1.msra.mxu0 0.0
    %570 = vmatprep.subr.mxu0 0.0
    %571 = vmatpush1.msra.mxu0 0.0
    %572 = vmatprep.mubr.f32.mxu0 0.0
    %573 = vmatmul.mubr.f32.gmra.mrb[0].mxu0 %v497
    %v574 = vpop.f32.mrb[0].mxu0
    %v575 = vadd.f32 0.0, %v574
    %v576 = vpop.f32.mrb[0].mxu0
    %577 = vmatprep.mubr.f32.mxu0 0.0
    %578 = vmatmul.mubr.f32.gmra.mrb[0].mxu0 %v500
    %v579 = vpop.f32.mrb[0].mxu0
    %v580 = vadd.f32 0.0, %v579
    %v581 = vpop.f32.mrb[0].mxu0
    %582 = vmatprep.mubr.f32.mxu0 0.0
    %583 = vmatmul.mubr.f32.gmra.mrb[0].mxu0 %v503
    %v584 = vpop.f32.mrb[0].mxu0
    %v585 = vadd.f32 0.0, %v584
    %v586 = vpop.f32.mrb[0].mxu0
    %587 = vmatprep.mubr.f32.mxu0 0.0
    %588 = vmatmul.mubr.f32.gmra.mrb[0].mxu0 %v506
    %v589 = vpop.f32.mrb[0].mxu0
    %v590 = vadd.f32 0.0, %v589
    %v591 = vpop.f32.mrb[0].mxu0
    %592 = vdwg.mxu0
    %v593 = vld [vmem:[%s14] sm:$0xff]
    %v594 = vld [vmem:[%s14 + $0x8] sm:$0xff]
    %v595 = vld [vmem:[%s14 + $0x10] sm:$0xff]
    %v596 = vld [vmem:[%s14 + $0x18] sm:$0xff]
    %v597 = vld [vmem:[%s14 + $0x20] sm:$0xff]
    %v598 = vld [vmem:[%s14 + $0x28] sm:$0xff]
    %v599 = vld [vmem:[%s14 + $0x30] sm:$0xff]
    %v600 = vld [vmem:[%s14 + $0x38] sm:$0xff]
    %v601 = vld [vmem:[%s11] sm:$0x1]
    %v602 = vld [vmem:[%s12] sm:$0x1]
    %v603 = vld [vmem:[#allocation2] sm:$0x1]
    %v604 = vld [vmem:[%s1] sm:$0xff]
    %v605 = vld [vmem:[%s1 + $0x8] sm:$0xff]
    %v606 = vld [vmem:[%s1 + $0x10] sm:$0xff]
    %v607 = vld [vmem:[%s1 + $0x18] sm:$0xff]
    %612 = vrot.lane.b32.xlu0 %v604, 8
    %v613 = vpop.permute.xlu0 %612
    %614 = vrot.lane.b32.xlu0 %v605, 8
    %v615 = vpop.permute.xlu0 %614
    %616 = vrot.lane.b32.xlu0 %v606, 8
    %v617 = vpop.permute.xlu0 %616
    %618 = vrot.lane.b32.xlu0 %v607, 8
    %v619 = vpop.permute.xlu0 %618
    %624 = vrot.lane.b32.xlu0 %v604, 16
    %v625 = vpop.permute.xlu0 %624
    %626 = vrot.lane.b32.xlu0 %v605, 16
    %v627 = vpop.permute.xlu0 %626
    %628 = vrot.lane.b32.xlu0 %v606, 16
    %v629 = vpop.permute.xlu0 %628
    %630 = vrot.lane.b32.xlu0 %v607, 16
    %v631 = vpop.permute.xlu0 %630
    %636 = vrot.lane.b32.xlu0 %v604, 24
    %v637 = vpop.permute.xlu0 %636
    %638 = vrot.lane.b32.xlu0 %v605, 24
    %v639 = vpop.permute.xlu0 %638
    %640 = vrot.lane.b32.xlu0 %v606, 24
    %v641 = vpop.permute.xlu0 %640
    %642 = vrot.lane.b32.xlu0 %v607, 24
    %v643 = vpop.permute.xlu0 %642
    %648 = vrot.lane.b32.xlu0 %v604, 32
    %v649 = vpop.permute.xlu0 %648
    %650 = vrot.lane.b32.xlu0 %v605, 32
    %v651 = vpop.permute.xlu0 %650
    %652 = vrot.lane.b32.xlu0 %v606, 32
    %v653 = vpop.permute.xlu0 %652
    %654 = vrot.lane.b32.xlu0 %v607, 32
    %v655 = vpop.permute.xlu0 %654
    %660 = vrot.lane.b32.xlu0 %v604, 40
    %v661 = vpop.permute.xlu0 %660
    %662 = vrot.lane.b32.xlu0 %v605, 40
    %v663 = vpop.permute.xlu0 %662
    %664 = vrot.lane.b32.xlu0 %v606, 40
    %v665 = vpop.permute.xlu0 %664
    %666 = vrot.lane.b32.xlu0 %v607, 40
    %v667 = vpop.permute.xlu0 %666
    %672 = vrot.lane.b32.xlu0 %v604, 48
    %v673 = vpop.permute.xlu0 %672
    %674 = vrot.lane.b32.xlu0 %v605, 48
    %v675 = vpop.permute.xlu0 %674
    %676 = vrot.lane.b32.xlu0 %v606, 48
    %v677 = vpop.permute.xlu0 %676
    %678 = vrot.lane.b32.xlu0 %v607, 48
    %v679 = vpop.permute.xlu0 %678
    %684 = vrot.lane.b32.xlu0 %v604, 56
    %v685 = vpop.permute.xlu0 %684
    %686 = vrot.lane.b32.xlu0 %v605, 56
    %v687 = vpop.permute.xlu0 %686
    %688 = vrot.lane.b32.xlu0 %v606, 56
    %v689 = vpop.permute.xlu0 %688
    %690 = vrot.lane.b32.xlu0 %v607, 56
    %v691 = vpop.permute.xlu0 %690
    %v696 = vsel %vm65, %v604, %v613
    %v697 = vsel %vm65, %v605, %v615
    %v698 = vsel %vm65, %v606, %v617
    %v699 = vsel %vm65, %v607, %v619
    %v700 = vsel %vm495, %v696, %v625
    %v701 = vsel %vm495, %v697, %v627
    %v702 = vsel %vm495, %v698, %v629
    %v703 = vsel %vm495, %v699, %v631
    %vm704 = vcmask 195584
    %v705 = vsel %vm704, %v700, %v637
    %v706 = vsel %vm704, %v701, %v639
    %v707 = vsel %vm704, %v702, %v641
    %v708 = vsel %vm704, %v703, %v643
    %v709 = vsel %vm178, %v705, %v649
    %v710 = vsel %vm178, %v706, %v651
    %v711 = vsel %vm178, %v707, %v653
    %v712 = vsel %vm178, %v708, %v655
    %vm713 = vcmask 326656
    %v714 = vsel %vm713, %v709, %v661
    %v715 = vsel %vm713, %v710, %v663
    %v716 = vsel %vm713, %v711, %v665
    %v717 = vsel %vm713, %v712, %v667
    %vm718 = vcmask 392192
    %v719 = vsel %vm718, %v714, %v673
    %v720 = vsel %vm718, %v715, %v675
    %v721 = vsel %vm718, %v716, %v677
    %v722 = vsel %vm718, %v717, %v679
    %vm723 = vcmask 457728
    %v724 = vsel %vm723, %v719, %v685
    %v725 = vsel %vm723, %v720, %v687
    %v726 = vsel %vm723, %v721, %v689
    %v727 = vsel %vm723, %v722, %v691
    %v728 = vmul.f32 %v575, %v724
    %v729 = vmul.f32 %v580, %v725
    %v730 = vmul.f32 %v585, %v726
    %v731 = vmul.f32 %v590, %v727
    %v733 = vlaneseq
    %v734 = vshrl.u32 %v733, 7
    %v735 = vsub.s32 0, %v734
    %v736 = vrot.slane %v601, %v735
    %vm738 = vcmask 523264
    %v740 = vsel %vm738, %v728, 0
    %v743 = vsel %vm738, %v729, 0
    %v746 = vsel %vm738, %v730, 0
    %v749 = vsel %vm738, %v731, 0
    %751 = vmatprep.subr.mxu0 0.0
    %752 = vmatpush1.msra.mxu0 %v593
    %753 = vmatprep.subr.mxu0 0.0
    %754 = vmatpush1.msra.mxu0 %v594
    %755 = vmatprep.subr.mxu0 0.0
    %756 = vmatpush1.msra.mxu0 %v595
    %757 = vmatprep.subr.mxu0 0.0
    %758 = vmatpush1.msra.mxu0 %v596
    %759 = vmatprep.subr.mxu0 0.0
    %760 = vmatpush1.msra.mxu0 %v597
    %761 = vmatprep.subr.mxu0 0.0
    %762 = vmatpush1.msra.mxu0 %v598
    %763 = vmatprep.subr.mxu0 0.0
    %764 = vmatpush1.msra.mxu0 %v599
    %765 = vmatprep.subr.mxu0 0.0
    %766 = vmatpush1.msra.mxu0 %v600
    %767 = vmatprep.subr.mxu0 0.0
    %768 = vmatpush1.msra.mxu0 0.0
    %769 = vmatprep.subr.mxu0 0.0
    %770 = vmatpush1.msra.mxu0 0.0
    %771 = vmatprep.subr.mxu0 0.0
    %772 = vmatpush1.msra.mxu0 0.0
    %773 = vmatprep.subr.mxu0 0.0
    %774 = vmatpush1.msra.mxu0 0.0
    %775 = vmatprep.subr.mxu0 0.0
    %776 = vmatpush1.msra.mxu0 0.0
    %777 = vmatprep.subr.mxu0 0.0
    %778 = vmatpush1.msra.mxu0 0.0
    %779 = vmatprep.subr.mxu0 0.0
    %780 = vmatpush1.msra.mxu0 0.0
    %781 = vmatprep.subr.mxu0 0.0
    %782 = vmatpush1.msra.mxu0 0.0
    %783 = vmatprep.subr.mxu0 0.0
    %784 = vmatpush1.msra.mxu0 0.0
    %785 = vmatprep.subr.mxu0 0.0
    %786 = vmatpush1.msra.mxu0 0.0
    %787 = vmatprep.subr.mxu0 0.0
    %788 = vmatpush1.msra.mxu0 0.0
    %789 = vmatprep.subr.mxu0 0.0
    %790 = vmatpush1.msra.mxu0 0.0
    %791 = vmatprep.subr.mxu0 0.0
    %792 = vmatpush1.msra.mxu0 0.0
    %793 = vmatprep.subr.mxu0 0.0
    %794 = vmatpush1.msra.mxu0 0.0
    %795 = vmatprep.subr.mxu0 0.0
    %796 = vmatpush1.msra.mxu0 0.0
    %797 = vmatprep.subr.mxu0 0.0
    %798 = vmatpush1.msra.mxu0 0.0
    %799 = vmatprep.subr.mxu0 0.0
    %800 = vmatpush1.msra.mxu0 0.0
    %801 = vmatprep.subr.mxu0 0.0
    %802 = vmatpush1.msra.mxu0 0.0
    %803 = vmatprep.subr.mxu0 0.0
    %804 = vmatpush1.msra.mxu0 0.0
    %805 = vmatprep.subr.mxu0 0.0
    %806 = vmatpush1.msra.mxu0 0.0
    %807 = vmatprep.subr.mxu0 0.0
    %808 = vmatpush1.msra.mxu0 0.0
    %809 = vmatprep.subr.mxu0 0.0
    %810 = vmatpush1.msra.mxu0 0.0
    %811 = vmatprep.subr.mxu0 0.0
    %812 = vmatpush1.msra.mxu0 0.0
    %813 = vmatprep.subr.mxu0 0.0
    %814 = vmatpush1.msra.mxu0 0.0
    %815 = vmatprep.mubr.f32.mxu0 0.0
    %816 = vmatmul.mubr.f32.gmra.mrb[0].mxu0 %v740
    %v817 = vpop.f32.mrb[0].mxu0
    %v818 = vadd.f32 %v736, %v817
    %v819 = vpop.f32.mrb[0].mxu0
    %820 = vmatprep.mubr.f32.mxu0 0.0
    %821 = vmatmul.mubr.f32.gmra.mrb[0].mxu0 %v743
    %v822 = vpop.f32.mrb[0].mxu0
    %v823 = vadd.f32 %v736, %v822
    %v824 = vpop.f32.mrb[0].mxu0
    %825 = vmatprep.mubr.f32.mxu0 0.0
    %826 = vmatmul.mubr.f32.gmra.mrb[0].mxu0 %v746
    %v827 = vpop.f32.mrb[0].mxu0
    %v828 = vadd.f32 %v736, %v827
    %v829 = vpop.f32.mrb[0].mxu0
    %830 = vmatprep.mubr.f32.mxu0 0.0
    %831 = vmatmul.mubr.f32.gmra.mrb[0].mxu0 %v749
    %v832 = vpop.f32.mrb[0].mxu0
    %v833 = vadd.f32 %v736, %v832
    %v834 = vpop.f32.mrb[0].mxu0
    %835 = vdwg.mxu0
    %v836 = vmax.f32 %v818, 0.0
    %v837 = vmax.f32 %v823, 0.0
    %v838 = vmax.f32 %v828, 0.0
    %v839 = vmax.f32 %v833, 0.0
    %841 = vset.pattern.permute.xlu0 0
    %842 = vperm.xlu0 %841, %v603
    %v843 = vpop.permute.xlu0 %842
    %v845 = vlaneseq
    %v846 = vshrl.u32 %v845, 7
    %v847 = vsub.s32 0, %v846
    %v848 = vrot.slane %v843, %v847
    %v850 = vsel %vm65, %v602, 0
    %v853 = vsel %vm65, %v836, 0
    %v856 = vsel %vm65, %v837, 0
    %v859 = vsel %vm65, %v838, 0
    %v862 = vsel %vm65, %v839, 0
    %864 = vmatprep.subr.mxu0 0.0
    %865 = vmatpush1.xpose.msra.mxu0 %v853
    %866 = vmatprep.subr.mxu0 0.0
    %867 = vmatpush1.xpose.msra.mxu0 %v856
    %868 = vmatprep.subr.mxu0 0.0
    %869 = vmatpush1.xpose.msra.mxu0 %v859
    %870 = vmatprep.subr.mxu0 0.0
    %871 = vmatpush1.xpose.msra.mxu0 %v862
    %872 = vmatprep.subr.mxu0 0.0
    %873 = vmatpush1.xpose.msra.mxu0 0.0
    %874 = vmatprep.subr.mxu0 0.0
    %875 = vmatpush1.xpose.msra.mxu0 0.0
    %876 = vmatprep.subr.mxu0 0.0
    %877 = vmatpush1.xpose.msra.mxu0 0.0
    %878 = vmatprep.subr.mxu0 0.0
    %879 = vmatpush1.xpose.msra.mxu0 0.0
    %880 = vmatprep.subr.mxu0 0.0
    %881 = vmatpush1.xpose.msra.mxu0 0.0
    %882 = vmatprep.subr.mxu0 0.0
    %883 = vmatpush1.xpose.msra.mxu0 0.0
    %884 = vmatprep.subr.mxu0 0.0
    %885 = vmatpush1.xpose.msra.mxu0 0.0
    %886 = vmatprep.subr.mxu0 0.0
    %887 = vmatpush1.xpose.msra.mxu0 0.0
    %888 = vmatprep.subr.mxu0 0.0
    %889 = vmatpush1.xpose.msra.mxu0 0.0
    %890 = vmatprep.subr.mxu0 0.0
    %891 = vmatpush1.xpose.msra.mxu0 0.0
    %892 = vmatprep.subr.mxu0 0.0
    %893 = vmatpush1.xpose.msra.mxu0 0.0
    %894 = vmatprep.subr.mxu0 0.0
    %895 = vmatpush1.xpose.msra.mxu0 0.0
    %896 = vmatprep.subr.mxu0 0.0
    %897 = vmatpush1.xpose.msra.mxu0 0.0
    %898 = vmatprep.subr.mxu0 0.0
    %899 = vmatpush1.xpose.msra.mxu0 0.0
    %900 = vmatprep.subr.mxu0 0.0
    %901 = vmatpush1.xpose.msra.mxu0 0.0
    %902 = vmatprep.subr.mxu0 0.0
    %903 = vmatpush1.xpose.msra.mxu0 0.0
    %904 = vmatprep.subr.mxu0 0.0
    %905 = vmatpush1.xpose.msra.mxu0 0.0
    %906 = vmatprep.subr.mxu0 0.0
    %907 = vmatpush1.xpose.msra.mxu0 0.0
    %908 = vmatprep.subr.mxu0 0.0
    %909 = vmatpush1.xpose.msra.mxu0 0.0
    %910 = vmatprep.subr.mxu0 0.0
    %911 = vmatpush1.xpose.msra.mxu0 0.0
    %912 = vmatprep.subr.mxu0 0.0
    %913 = vmatpush1.xpose.msra.mxu0 0.0
    %914 = vmatprep.subr.mxu0 0.0
    %915 = vmatpush1.xpose.msra.mxu0 0.0
    %916 = vmatprep.subr.mxu0 0.0
    %917 = vmatpush1.xpose.msra.mxu0 0.0
    %918 = vmatprep.subr.mxu0 0.0
    %919 = vmatpush1.xpose.msra.mxu0 0.0
    %920 = vmatprep.subr.mxu0 0.0
    %921 = vmatpush1.xpose.msra.mxu0 0.0
    %922 = vmatprep.subr.mxu0 0.0
    %923 = vmatpush1.xpose.msra.mxu0 0.0
    %924 = vmatprep.subr.mxu0 0.0
    %925 = vmatpush1.xpose.msra.mxu0 0.0
    %926 = vmatprep.subr.mxu0 0.0
    %927 = vmatpush1.xpose.msra.mxu0 0.0
    %928 = vmatprep.mubr.f32.mxu0 0.0
    %929 = vmatmul.mubr.f32.gmra.mrb[0].mxu0 %v850
    %v930 = vpop.f32.mrb[0].mxu0
    %v931 = vadd.f32 %v848, %v930
    %v932 = vpop.f32.mrb[0].mxu0
    %933 = vdwg.mxu0
    %v934 = vld [vmem:[%s2] sm:$0xff]
    %v935 = vld [vmem:[%s2 + $0x8] sm:$0xff]
    %v936 = vld [vmem:[%s2 + $0x10] sm:$0xff]
    %v937 = vld [vmem:[%s2 + $0x18] sm:$0xff]
    %942 = vrot.lane.b32.xlu0 %v934, 8
    %v943 = vpop.permute.xlu0 %942
    %944 = vrot.lane.b32.xlu0 %v935, 8
    %v945 = vpop.permute.xlu0 %944
    %946 = vrot.lane.b32.xlu0 %v936, 8
    %v947 = vpop.permute.xlu0 %946
    %948 = vrot.lane.b32.xlu0 %v937, 8
    %v949 = vpop.permute.xlu0 %948
    %954 = vrot.lane.b32.xlu0 %v934, 16
    %v955 = vpop.permute.xlu0 %954
    %956 = vrot.lane.b32.xlu0 %v935, 16
    %v957 = vpop.permute.xlu0 %956
    %958 = vrot.lane.b32.xlu0 %v936, 16
    %v959 = vpop.permute.xlu0 %958
    %960 = vrot.lane.b32.xlu0 %v937, 16
    %v961 = vpop.permute.xlu0 %960
    %966 = vrot.lane.b32.xlu0 %v934, 24
    %v967 = vpop.permute.xlu0 %966
    %968 = vrot.lane.b32.xlu0 %v935, 24
    %v969 = vpop.permute.xlu0 %968
    %970 = vrot.lane.b32.xlu0 %v936, 24
    %v971 = vpop.permute.xlu0 %970
    %972 = vrot.lane.b32.xlu0 %v937, 24
    %v973 = vpop.permute.xlu0 %972
    %978 = vrot.lane.b32.xlu0 %v934, 32
    %v979 = vpop.permute.xlu0 %978
    %980 = vrot.lane.b32.xlu0 %v935, 32
    %v981 = vpop.permute.xlu0 %980
    %982 = vrot.lane.b32.xlu0 %v936, 32
    %v983 = vpop.permute.xlu0 %982
    %984 = vrot.lane.b32.xlu0 %v937, 32
    %v985 = vpop.permute.xlu0 %984
    %990 = vrot.lane.b32.xlu0 %v934, 40
    %v991 = vpop.permute.xlu0 %990
    %992 = vrot.lane.b32.xlu0 %v935, 40
    %v993 = vpop.permute.xlu0 %992
    %994 = vrot.lane.b32.xlu0 %v936, 40
    %v995 = vpop.permute.xlu0 %994
    %996 = vrot.lane.b32.xlu0 %v937, 40
    %v997 = vpop.permute.xlu0 %996
    %1002 = vrot.lane.b32.xlu0 %v934, 48
    %v1003 = vpop.permute.xlu0 %1002
    %1004 = vrot.lane.b32.xlu0 %v935, 48
    %v1005 = vpop.permute.xlu0 %1004
    %1006 = vrot.lane.b32.xlu0 %v936, 48
    %v1007 = vpop.permute.xlu0 %1006
    %1008 = vrot.lane.b32.xlu0 %v937, 48
    %v1009 = vpop.permute.xlu0 %1008
    %1014 = vrot.lane.b32.xlu0 %v934, 56
    %v1015 = vpop.permute.xlu0 %1014
    %1016 = vrot.lane.b32.xlu0 %v935, 56
    %v1017 = vpop.permute.xlu0 %1016
    %1018 = vrot.lane.b32.xlu0 %v936, 56
    %v1019 = vpop.permute.xlu0 %1018
    %1020 = vrot.lane.b32.xlu0 %v937, 56
    %v1021 = vpop.permute.xlu0 %1020
    %v1026 = vsel %vm65, %v934, %v943
    %v1027 = vsel %vm65, %v935, %v945
    %v1028 = vsel %vm65, %v936, %v947
    %v1029 = vsel %vm65, %v937, %v949
    %v1030 = vsel %vm495, %v1026, %v955
    %v1031 = vsel %vm495, %v1027, %v957
    %v1032 = vsel %vm495, %v1028, %v959
    %v1033 = vsel %vm495, %v1029, %v961
    %v1034 = vsel %vm704, %v1030, %v967
    %v1035 = vsel %vm704, %v1031, %v969
    %v1036 = vsel %vm704, %v1032, %v971
    %v1037 = vsel %vm704, %v1033, %v973
    %v1038 = vsel %vm178, %v1034, %v979
    %v1039 = vsel %vm178, %v1035, %v981
    %v1040 = vsel %vm178, %v1036, %v983
    %v1041 = vsel %vm178, %v1037, %v985
    %v1042 = vsel %vm713, %v1038, %v991
    %v1043 = vsel %vm713, %v1039, %v993
    %v1044 = vsel %vm713, %v1040, %v995
    %v1045 = vsel %vm713, %v1041, %v997
    %v1046 = vsel %vm718, %v1042, %v1003
    %v1047 = vsel %vm718, %v1043, %v1005
    %v1048 = vsel %vm718, %v1044, %v1007
    %v1049 = vsel %vm718, %v1045, %v1009
    %v1050 = vsel %vm723, %v1046, %v1015
    %v1051 = vsel %vm723, %v1047, %v1017
    %v1052 = vsel %vm723, %v1048, %v1019
    %v1053 = vsel %vm723, %v1049, %v1021
    %v1054 = vmul.f32 %v575, %v1050
    %v1055 = vmul.f32 %v580, %v1051
    %v1056 = vmul.f32 %v585, %v1052
    %v1057 = vmul.f32 %v590, %v1053
    %v1059 = vsel %vm738, %v1054, 0
    %v1062 = vsel %vm738, %v1055, 0
    %v1065 = vsel %vm738, %v1056, 0
    %v1068 = vsel %vm738, %v1057, 0
    %1070 = vmatprep.subr.mxu0 0.0
    %1071 = vmatpush1.msra.mxu0 %v593
    %1072 = vmatprep.subr.mxu0 0.0
    %1073 = vmatpush1.msra.mxu0 %v594
    %1074 = vmatprep.subr.mxu0 0.0
    %1075 = vmatpush1.msra.mxu0 %v595
    %1076 = vmatprep.subr.mxu0 0.0
    %1077 = vmatpush1.msra.mxu0 %v596
    %1078 = vmatprep.subr.mxu0 0.0
    %1079 = vmatpush1.msra.mxu0 %v597
    %1080 = vmatprep.subr.mxu0 0.0
    %1081 = vmatpush1.msra.mxu0 %v598
    %1082 = vmatprep.subr.mxu0 0.0
    %1083 = vmatpush1.msra.mxu0 %v599
    %1084 = vmatprep.subr.mxu0 0.0
    %1085 = vmatpush1.msra.mxu0 %v600
    %1086 = vmatprep.subr.mxu0 0.0
    %1087 = vmatpush1.msra.mxu0 0.0
    %1088 = vmatprep.subr.mxu0 0.0
    %1089 = vmatpush1.msra.mxu0 0.0
    %1090 = vmatprep.subr.mxu0 0.0
    %1091 = vmatpush1.msra.mxu0 0.0
    %1092 = vmatprep.subr.mxu0 0.0
    %1093 = vmatpush1.msra.mxu0 0.0
    %1094 = vmatprep.subr.mxu0 0.0
    %1095 = vmatpush1.msra.mxu0 0.0
    %1096 = vmatprep.subr.mxu0 0.0
    %1097 = vmatpush1.msra.mxu0 0.0
    %1098 = vmatprep.subr.mxu0 0.0
    %1099 = vmatpush1.msra.mxu0 0.0
    %1100 = vmatprep.subr.mxu0 0.0
    %1101 = vmatpush1.msra.mxu0 0.0
    %1102 = vmatprep.subr.mxu0 0.0
    %1103 = vmatpush1.msra.mxu0 0.0
    %1104 = vmatprep.subr.mxu0 0.0
    %1105 = vmatpush1.msra.mxu0 0.0
    %1106 = vmatprep.subr.mxu0 0.0
    %1107 = vmatpush1.msra.mxu0 0.0
    %1108 = vmatprep.subr.mxu0 0.0
    %1109 = vmatpush1.msra.mxu0 0.0
    %1110 = vmatprep.subr.mxu0 0.0
    %1111 = vmatpush1.msra.mxu0 0.0
    %1112 = vmatprep.subr.mxu0 0.0
    %1113 = vmatpush1.msra.mxu0 0.0
    %1114 = vmatprep.subr.mxu0 0.0
    %1115 = vmatpush1.msra.mxu0 0.0
    %1116 = vmatprep.subr.mxu0 0.0
    %1117 = vmatpush1.msra.mxu0 0.0
    %1118 = vmatprep.subr.mxu0 0.0
    %1119 = vmatpush1.msra.mxu0 0.0
    %1120 = vmatprep.subr.mxu0 0.0
    %1121 = vmatpush1.msra.mxu0 0.0
    %1122 = vmatprep.subr.mxu0 0.0
    %1123 = vmatpush1.msra.mxu0 0.0
    %1124 = vmatprep.subr.mxu0 0.0
    %1125 = vmatpush1.msra.mxu0 0.0
    %1126 = vmatprep.subr.mxu0 0.0
    %1127 = vmatpush1.msra.mxu0 0.0
    %1128 = vmatprep.subr.mxu0 0.0
    %1129 = vmatpush1.msra.mxu0 0.0
    %1130 = vmatprep.subr.mxu0 0.0
    %1131 = vmatpush1.msra.mxu0 0.0
    %1132 = vmatprep.subr.mxu0 0.0
    %1133 = vmatpush1.msra.mxu0 0.0
    %1134 = vmatprep.mubr.f32.mxu0 0.0
    %1135 = vmatmul.mubr.f32.gmra.mrb[0].mxu0 %v1059
    %v1136 = vpop.f32.mrb[0].mxu0
    %v1137 = vadd.f32 %v736, %v1136
    %v1138 = vpop.f32.mrb[0].mxu0
    %1139 = vmatprep.mubr.f32.mxu0 0.0
    %1140 = vmatmul.mubr.f32.gmra.mrb[0].mxu0 %v1062
    %v1141 = vpop.f32.mrb[0].mxu0
    %v1142 = vadd.f32 %v736, %v1141
    %v1143 = vpop.f32.mrb[0].mxu0
    %1144 = vmatprep.mubr.f32.mxu0 0.0
    %1145 = vmatmul.mubr.f32.gmra.mrb[0].mxu0 %v1065
    %v1146 = vpop.f32.mrb[0].mxu0
    %v1147 = vadd.f32 %v736, %v1146
    %v1148 = vpop.f32.mrb[0].mxu0
    %1149 = vmatprep.mubr.f32.mxu0 0.0
    %1150 = vmatmul.mubr.f32.gmra.mrb[0].mxu0 %v1068
    %v1151 = vpop.f32.mrb[0].mxu0
    %v1152 = vadd.f32 %v736, %v1151
    %v1153 = vpop.f32.mrb[0].mxu0
    %1154 = vdwg.mxu0
    %v1155 = vmax.f32 %v1137, 0.0
    %v1156 = vmax.f32 %v1142, 0.0
    %v1157 = vmax.f32 %v1147, 0.0
    %v1158 = vmax.f32 %v1152, 0.0
    %v1160 = vsel %vm65, %v1155, 0
    %v1163 = vsel %vm65, %v1156, 0
    %v1166 = vsel %vm65, %v1157, 0
    %v1169 = vsel %vm65, %v1158, 0
    %1171 = vmatprep.subr.mxu0 0.0
    %1172 = vmatpush1.xpose.msra.mxu0 %v1160
    %1173 = vmatprep.subr.mxu0 0.0
    %1174 = vmatpush1.xpose.msra.mxu0 %v1163
    %1175 = vmatprep.subr.mxu0 0.0
    %1176 = vmatpush1.xpose.msra.mxu0 %v1166
    %1177 = vmatprep.subr.mxu0 0.0
    %1178 = vmatpush1.xpose.msra.mxu0 %v1169
    %1179 = vmatprep.subr.mxu0 0.0
    %1180 = vmatpush1.xpose.msra.mxu0 0.0
    %1181 = vmatprep.subr.mxu0 0.0
    %1182 = vmatpush1.xpose.msra.mxu0 0.0
    %1183 = vmatprep.subr.mxu0 0.0
    %1184 = vmatpush1.xpose.msra.mxu0 0.0
    %1185 = vmatprep.subr.mxu0 0.0
    %1186 = vmatpush1.xpose.msra.mxu0 0.0
    %1187 = vmatprep.subr.mxu0 0.0
    %1188 = vmatpush1.xpose.msra.mxu0 0.0
    %1189 = vmatprep.subr.mxu0 0.0
    %1190 = vmatpush1.xpose.msra.mxu0 0.0
    %1191 = vmatprep.subr.mxu0 0.0
    %1192 = vmatpush1.xpose.msra.mxu0 0.0
    %1193 = vmatprep.subr.mxu0 0.0
    %1194 = vmatpush1.xpose.msra.mxu0 0.0
    %1195 = vmatprep.subr.mxu0 0.0
    %1196 = vmatpush1.xpose.msra.mxu0 0.0
    %1197 = vmatprep.subr.mxu0 0.0
    %1198 = vmatpush1.xpose.msra.mxu0 0.0
    %1199 = vmatprep.subr.mxu0 0.0
    %1200 = vmatpush1.xpose.msra.mxu0 0.0
    %1201 = vmatprep.subr.mxu0 0.0
    %1202 = vmatpush1.xpose.msra.mxu0 0.0
    %1203 = vmatprep.subr.mxu0 0.0
    %1204 = vmatpush1.xpose.msra.mxu0 0.0
    %1205 = vmatprep.subr.mxu0 0.0
    %1206 = vmatpush1.xpose.msra.mxu0 0.0
    %1207 = vmatprep.subr.mxu0 0.0
    %1208 = vmatpush1.xpose.msra.mxu0 0.0
    %1209 = vmatprep.subr.mxu0 0.0
    %1210 = vmatpush1.xpose.msra.mxu0 0.0
    %1211 = vmatprep.subr.mxu0 0.0
    %1212 = vmatpush1.xpose.msra.mxu0 0.0
    %1213 = vmatprep.subr.mxu0 0.0
    %1214 = vmatpush1.xpose.msra.mxu0 0.0
    %1215 = vmatprep.subr.mxu0 0.0
    %1216 = vmatpush1.xpose.msra.mxu0 0.0
    %1217 = vmatprep.subr.mxu0 0.0
    %1218 = vmatpush1.xpose.msra.mxu0 0.0
    %1219 = vmatprep.subr.mxu0 0.0
    %1220 = vmatpush1.xpose.msra.mxu0 0.0
    %1221 = vmatprep.subr.mxu0 0.0
    %1222 = vmatpush1.xpose.msra.mxu0 0.0
    %1223 = vmatprep.subr.mxu0 0.0
    %1224 = vmatpush1.xpose.msra.mxu0 0.0
    %1225 = vmatprep.subr.mxu0 0.0
    %1226 = vmatpush1.xpose.msra.mxu0 0.0
    %1227 = vmatprep.subr.mxu0 0.0
    %1228 = vmatpush1.xpose.msra.mxu0 0.0
    %1229 = vmatprep.subr.mxu0 0.0
    %1230 = vmatpush1.xpose.msra.mxu0 0.0
    %1231 = vmatprep.subr.mxu0 0.0
    %1232 = vmatpush1.xpose.msra.mxu0 0.0
    %1233 = vmatprep.subr.mxu0 0.0
    %1234 = vmatpush1.xpose.msra.mxu0 0.0
    %1235 = vmatprep.mubr.f32.mxu0 0.0
    %1236 = vmatmul.mubr.f32.gmra.mrb[0].mxu0 %v850
    %v1237 = vpop.f32.mrb[0].mxu0
    %v1238 = vadd.f32 %v848, %v1237
    %v1239 = vpop.f32.mrb[0].mxu0
    %1240 = vdwg.mxu0
    %1242 = vrot.lane.b32.xlu0 %v1238, 32
    %v1243 = vpop.permute.xlu0 %1242
    %v1245 = vsel %vm178, %v931, %v1243
    %v1246 = vxor.u32 %v1245, 2147483648
    %v1247 = vmul.f32 %v1246, 1.442695
    %v1248 = vpow.pop %v1247
    %v1249 = vadd.f32 %v1248, 1.0
    %v1250 = vrcp.pop %v1249
    %v1251 = vmul.f32 1.0, %v1250
    %v1252 = vsel %vm738, %v1251, 0.0
    %1253 = vst [vmem:[#allocation3] sm:$0x1] %v1252
    // Predicated region
    $region62: #{tpu_custom_call.1} parent=1 // pred_check
      _
    $region63: #{tpu_custom_call.1} parent=1 // pred_check_branch
      %1255 = sbr.rel (0) target = $region65
    $region64: #{tpu_custom_call.1} parent=1 // pred_region
      %s1257 = ssub.s32 16, 16
      %1258 = vsyncadd [#allocation4], %s1257
      %s1260 = sshll.u32 [#allocation3], 4
      %s1261 = int_to_ptr.vmem [resolvable:$true] %s1260
      %1263 = dma.vmem_to_hbm [thread:$0]  %s1261, 16, %s15, [#allocation4]
    $region65: #{tpu_custom_call.1} parent=1 // pred_fallthru
      _
    // Predicated region
    $region66: #{tpu_custom_call.1} parent=1 // pred_check
      _
    $region67: #{tpu_custom_call.1} parent=1 // pred_check_branch
      %1265 = sbr.rel (0) target = $region69
    $region68: #{tpu_custom_call.1} parent=1 // pred_region
      %1266 = dma.done [#allocation4], 16
    $region69: #{tpu_custom_call.1} parent=1 // pred_fallthru
      _
    %1267 = vsyncpa [#allocation4], 1

</llo_original>
